<compile_context>
chip_gen: v7x
topology: tpu7x:2x2x1
jax: 0.10.0
libtpu: 0.0.40
codegen_flags: <defaults>
</compile_context>

<pallas_src>
import jax
import jax.numpy as jnp
from jax import lax
from jax.experimental import pallas as pl
from jax.experimental.pallas import tpu as pltpu


# ---------------------------------------------------------------------------
# Pallas kernels
# ---------------------------------------------------------------------------
def _conv_plane_kernel(x_ref, w_ref, y_ref, sum_ref, ssq_ref, acc_ref):
    """One (n, d, kd) grid step of the 3x3x3 conv.

    x_ref  : [H+2, (W+2)*Cin]   padded input plane at depth d+kd
    w_ref  : [3, (W+2)*Cin, W*Cout]  banded weights for this kd (kh-major)
    y_ref  : [H, W*Cout]        conv output plane (written at last kd)
    sum_ref, ssq_ref : [1, W*Cout]  per-plane partial BN statistics
    acc_ref: VMEM scratch [H, W*Cout] float32 accumulator
    """
    kd = pl.program_id(2)
    H = y_ref.shape[0]

    @pl.when(kd == 0)
    def _init():
        acc_ref[...] = jnp.zeros_like(acc_ref)

    acc_ref[...] += (
        jnp.dot(x_ref[0:H, :], w_ref[0], preferred_element_type=jnp.float32)
        + jnp.dot(x_ref[1:H + 1, :], w_ref[1], preferred_element_type=jnp.float32)
        + jnp.dot(x_ref[2:H + 2, :], w_ref[2], preferred_element_type=jnp.float32)
    )

    @pl.when(kd == pl.num_programs(2) - 1)
    def _finalize():
        a = acc_ref[...]
        y_ref[...] = a
        sum_ref[...] = jnp.sum(a, axis=0, keepdims=True)
        ssq_ref[...] = jnp.sum(a * a, axis=0, keepdims=True)


def _bn_relu_kernel(x_ref, s_ref, t_ref, o_ref):
    o_ref[...] = jnp.maximum(x_ref[...] * s_ref[...] + t_ref[...], 0.0)


# ---------------------------------------------------------------------------
# Small helpers / glue
# ---------------------------------------------------------------------------
def _pick_lane(total, cout):
    """Largest lane width (multiple of 128 and of Cout) dividing `total`."""
    for L in (1024, 512, 256, 128):
        if total % L == 0 and L % cout == 0:
            return L
    return cout  # fallback (not lane-dense, still correct)


def _pick_row_tile(rows):
    for t in (1024, 512, 256, 128, 64, 32, 16, 8):
        if rows % t == 0:
            return t
    return rows


def make_banded_weights(w, W):
    """PyTorch Conv3d weight [Cout, Cin, 3, 3, 3] -> [3, 3, (W+2)*Cin, W*Cout].

    wband[kd, kh, wp*Cin+ci, wo*Cout+co] = w[co, ci, kd, kh, wp-wo] if 0<=wp-wo<=2 else 0,
    so one matmul of a padded plane slice [H, (W+2)*Cin] against wband[kd, kh]
    contracts kw and Cin simultaneously (no in-kernel im2col or reshape).
    """
    wt = jnp.transpose(w, (2, 3, 4, 1, 0))  # [kd, kh, kw, ci, co]
    Cin, Cout = wt.shape[3], wt.shape[4]
    wp = jnp.arange(W + 2)[:, None]
    wo = jnp.arange(W)[None, :]
    kw = wp - wo                                             # [W+2, W]
    valid = ((kw >= 0) & (kw <= 2)).astype(w.dtype)
    band = wt[:, :, jnp.clip(kw, 0, 2), :, :] * valid[None, None, :, :, None, None]
    # [3,3,W+2,W,Cin,Cout] -> [3,3,W+2,Cin,W,Cout] -> [3,3,(W+2)*Cin, W*Cout]
    return jnp.transpose(band, (0, 1, 2, 4, 3, 5)).reshape(3, 3, (W + 2) * Cin, W * Cout)


def bn_relu(y2d, scale_row, shift_row):
    """relu(y * scale + shift) on a lane-dense [R, L] view."""
    R, L = y2d.shape
    rt = _pick_row_tile(R)
    return pl.pallas_call(
        _bn_relu_kernel,
        out_shape=jax.ShapeDtypeStruct((R, L), jnp.float32),
        grid=(R // rt,),
        in_specs=[
            pl.BlockSpec((rt, L), lambda i: (i, 0)),
            pl.BlockSpec((1, L), lambda i: (0, 0)),
            pl.BlockSpec((1, L), lambda i: (0, 0)),
        ],
        out_specs=pl.BlockSpec((rt, L), lambda i: (i, 0)),
        compiler_params=pltpu.CompilerParams(
            dimension_semantics=("parallel",),
            vmem_limit_bytes=32 * 1024 * 1024,
        ),
    )(y2d, scale_row, shift_row)


def conv_bn_relu_block(x_ndhwc, w, gamma, beta, eps=1e-5):
    """x: [N, D, H, W, Cin]; w: [Cout, Cin, 3, 3, 3] (PyTorch layout)."""
    N, D, H, W, Cin = x_ndhwc.shape
    Cout = int(w.shape[0])
    Kb, Nb = (W + 2) * Cin, W * Cout

    # Zero "same" padding + fold (W, Cin) into the lane axis (free reshape).
    xp = jnp.pad(x_ndhwc, ((0, 0), (1, 1), (1, 1), (1, 1), (0, 0)))
    xp3 = xp.reshape(N, D + 2, H + 2, Kb)
    wband = make_banded_weights(w.astype(jnp.float32), W)

    # Conv (bias dropped: cancelled by training-mode BN) + fused partial stats.
    y, psum, pssq = pl.pallas_call(
        _conv_plane_kernel,
        out_shape=(
            jax.ShapeDtypeStruct((N, D, H, Nb), jnp.float32),
            jax.ShapeDtypeStruct((N, D, 1, Nb), jnp.float32),
            jax.ShapeDtypeStruct((N, D, 1, Nb), jnp.float32),
        ),
        grid=(N, D, 3),
        in_specs=[
            pl.BlockSpec((None, None, H + 2, Kb), lambda n, d, kd: (n, d + kd, 0, 0)),
            pl.BlockSpec((None, 3, Kb, Nb), lambda n, d, kd: (kd, 0, 0, 0)),
        ],
        out_specs=(
            pl.BlockSpec((None, None, H, Nb), lambda n, d, kd: (n, d, 0, 0)),
            pl.BlockSpec((None, None, 1, Nb), lambda n, d, kd: (n, d, 0, 0)),
            pl.BlockSpec((None, None, 1, Nb), lambda n, d, kd: (n, d, 0, 0)),
        ),
        scratch_shapes=[pltpu.VMEM((H, Nb), jnp.float32)],
        compiler_params=pltpu.CompilerParams(
            dimension_semantics=("parallel", "parallel", "arbitrary"),
            vmem_limit_bytes=32 * 1024 * 1024,
        ),
    )(xp3, wband)

    # Finish BN statistics with a tiny reduction (biased variance, training mode).
    # TODO(synk): running_mean/running_var buffer updates (training-time side
    # effect) are not reproduced; they do not affect the forward output.
    M = N * D * H * W
    ch_sum = psum.reshape(-1, Cout).sum(axis=0)
    ch_ssq = pssq.reshape(-1, Cout).sum(axis=0)
    mean = ch_sum / M
    var = ch_ssq / M - mean * mean
    scale = gamma / jnp.sqrt(var + eps)
    shift = beta - mean * scale

    # Lane-dense BN-affine + ReLU pass.
    total = M * Cout
    L = _pick_lane(total, Cout)
    R = total // L
    z2d = bn_relu(
        y.reshape(R, L),
        jnp.tile(scale, L // Cout).reshape(1, L),
        jnp.tile(shift, L // Cout).reshape(1, L),
    )
    return z2d.reshape(N, D, H, W, Cout)


def unet_layer(x_ncdhw, params):
    """Mirrors UNetLayer.forward: conv1 -> bn1 -> relu -> conv2 -> bn2 -> relu.

    Conv biases (params['b1'], params['b2']) are intentionally unused: they are
    exactly cancelled by the batch-mean subtraction of training-mode BatchNorm.
    """
    x = jnp.transpose(x_ncdhw, (0, 2, 3, 4, 1))  # NCDHW -> NDHWC
    z1 = conv_bn_relu_block(x, params["w1"], params["g1"], params["be1"])
    z2 = conv_bn_relu_block(z1, params["w2"], params["g2"], params["be2"])
    return jnp.transpose(z2, (0, 4, 1, 2, 3))    # NDHWC -> NCDHW


# ---------------------------------------------------------------------------
# Pure-JAX reference (correctness check only)
# ---------------------------------------------------------------------------
def unet_layer_ref(x_ncdhw, params, eps=1e-5):
    x = jnp.transpose(x_ncdhw, (0, 2, 3, 4, 1))

    def block(x, w, b, g, be):
        wj = jnp.transpose(w, (2, 3, 4, 1, 0))  # DHWIO
        y = lax.conv_general_dilated(
            x, wj, (1, 1, 1), "SAME",
            dimension_numbers=("NDHWC", "DHWIO", "NDHWC")) + b
        mean = jnp.mean(y, axis=(0, 1, 2, 3))
        var = jnp.mean((y - mean) ** 2, axis=(0, 1, 2, 3))
        return jnp.maximum((y - mean) / jnp.sqrt(var + eps) * g + be, 0.0)

    z1 = block(x, params["w1"], params["b1"], params["g1"], params["be1"])
    z2 = block(z1, params["w2"], params["b2"], params["g2"], params["be2"])
    return jnp.transpose(z2, (0, 4, 1, 2, 3))


# ---------------------------------------------------------------------------
if __name__ == "__main__":
    N, Cin, Cout, D, H, W = 2, 4, 8, 8, 8, 8

    key = jax.random.PRNGKey(0)
    ks = jax.random.split(key, 9)
    params = {
        "w1": 0.1 * jax.random.normal(ks[0], (Cout, Cin, 3, 3, 3), jnp.float32),
        "b1": 0.1 * jax.random.normal(ks[1], (Cout,), jnp.float32),
        "g1": 1.0 + 0.1 * jax.random.normal(ks[2], (Cout,), jnp.float32),
        "be1": 0.1 * jax.random.normal(ks[3], (Cout,), jnp.float32),
        "w2": 0.1 * jax.random.normal(ks[4], (Cout, Cout, 3, 3, 3), jnp.float32),
        "b2": 0.1 * jax.random.normal(ks[5], (Cout,), jnp.float32),
        "g2": 1.0 + 0.1 * jax.random.normal(ks[6], (Cout,), jnp.float32),
        "be2": 0.1 * jax.random.normal(ks[7], (Cout,), jnp.float32),
    }
    x = jax.random.normal(ks[8], (N, Cin, D, H, W), jnp.float32)  # NCDHW like PyTorch

    out = jax.block_until_ready(jax.jit(unet_layer)(x, params))
    ref = jax.block_until_ready(unet_layer_ref(x, params))

    assert out.shape == (N, Cout, D, H, W)
    max_err = float(jnp.max(jnp.abs(out - ref)))
    assert max_err < 1e-3, f"mismatch vs reference: max_err={max_err}"

    print("KERNEL_OK")
</pallas_src>

<mosaic_0001>
module attributes {stable_mosaic.version = 11 : i64} {
  func.func @_conv_plane_kernel(%arg0: i32, %arg1: i32, %arg2: i32, %arg3: memref<1x1x10x40xf32, #tpu.memory_space<vmem>>, %arg4: memref<1x3x40x64xf32, #tpu.memory_space<vmem>>, %arg5: memref<1x1x8x64xf32, #tpu.memory_space<vmem>>, %arg6: memref<1x1x1x64xf32, #tpu.memory_space<vmem>>, %arg7: memref<1x1x1x64xf32, #tpu.memory_space<vmem>>, %arg8: memref<8x64xf32, #tpu.memory_space<vmem>>) attributes {dimension_semantics = [#tpu.dimension_semantics<parallel>, #tpu.dimension_semantics<parallel>, #tpu.dimension_semantics<arbitrary>], iteration_bounds = array<i64: 2, 8, 3>, scalar_prefetch = 0 : i64, scratch_operands = 1 : i64, tpu.core_type = #tpu.core_type<tc>, window_params = [{transform_indices = @transform_0, window_bounds = array<i64: 1, 1, 10, 40>}, {transform_indices = @transform_1, window_bounds = array<i64: 1, 3, 40, 64>}, {transform_indices = @transform_2, window_bounds = array<i64: 1, 1, 8, 64>}, {transform_indices = @transform_3, window_bounds = array<i64: 1, 1, 1, 64>}, {transform_indices = @transform_4, window_bounds = array<i64: 1, 1, 1, 64>}]} {
    %c0_i32 = arith.constant 0 : i32
    %0 = arith.cmpi eq, %arg2, %c0_i32 : i32
    %1 = arith.extui %0 : i1 to i32
    %c0_i32_0 = arith.constant 0 : i32
    %2 = arith.cmpi ne, %1, %c0_i32_0 : i32
    scf.if %2 {
      %cst_29 = arith.constant 0.000000e+00 : f32
      %26 = vector.broadcast %cst_29 : f32 to vector<8x64xf32>
      %c0_30 = arith.constant 0 : index
      %c0_31 = arith.constant 0 : index
      %27 = vector.load %arg8[%c0_30, %c0_31] : memref<8x64xf32, #tpu.memory_space<vmem>>, vector<8x64xf32>
      tpu.vector_store %arg8[%c0_30, %c0_31], %26 {strides = array<i32>} : memref<8x64xf32, #tpu.memory_space<vmem>>, vector<8x64xf32>,
    } else {
    }
    %c0 = arith.constant 0 : index
    %c0_1 = arith.constant 0 : index
    %3 = vector.load %arg8[%c0, %c0_1] : memref<8x64xf32, #tpu.memory_space<vmem>>, vector<8x64xf32>
    %c0_2 = arith.constant 0 : index
    %c0_3 = arith.constant 0 : index
    %c0_4 = arith.constant 0 : index
    %c0_5 = arith.constant 0 : index
    %4 = vector.load %arg3[%c0_2, %c0_3, %c0_4, %c0_5] : memref<1x1x10x40xf32, #tpu.memory_space<vmem>>, vector<1x1x8x40xf32>
    %5 = vector.shape_cast %4 : vector<1x1x8x40xf32> to vector<8x40xf32>
    %c0_6 = arith.constant 0 : index
    %c0_7 = arith.constant 0 : index
    %c0_8 = arith.constant 0 : index
    %c0_9 = arith.constant 0 : index
    %6 = vector.load %arg4[%c0_6, %c0_7, %c0_8, %c0_9] : memref<1x3x40x64xf32, #tpu.memory_space<vmem>>, vector<1x1x40x64xf32>
    %7 = vector.shape_cast %6 : vector<1x1x40x64xf32> to vector<40x64xf32>
    %cst = arith.constant dense<0.000000e+00> : vector<8x64xf32>
    %8 = tpu.matmul %5, %7, %cst {dimension_numbers = #tpu.dot_dimension_numbers<[1], [0], [0], [1], [0, 0, 1, 1], [], []>} : vector<8x40xf32>, vector<40x64xf32>, vector<8x64xf32> -> vector<8x64xf32>
    %c0_10 = arith.constant 0 : index
    %c0_11 = arith.constant 0 : index
    %c1 = arith.constant 1 : index
    %c0_12 = arith.constant 0 : index
    %9 = vector.load %arg3[%c0_10, %c0_11, %c1, %c0_12] : memref<1x1x10x40xf32, #tpu.memory_space<vmem>>, vector<1x1x8x40xf32>
    %10 = vector.shape_cast %9 : vector<1x1x8x40xf32> to vector<8x40xf32>
    %c0_13 = arith.constant 0 : index
    %c1_14 = arith.constant 1 : index
    %c0_15 = arith.constant 0 : index
    %c0_16 = arith.constant 0 : index
    %11 = vector.load %arg4[%c0_13, %c1_14, %c0_15, %c0_16] : memref<1x3x40x64xf32, #tpu.memory_space<vmem>>, vector<1x1x40x64xf32>
    %12 = vector.shape_cast %11 : vector<1x1x40x64xf32> to vector<40x64xf32>
    %cst_17 = arith.constant dense<0.000000e+00> : vector<8x64xf32>
    %13 = tpu.matmul %10, %12, %cst_17 {dimension_numbers = #tpu.dot_dimension_numbers<[1], [0], [0], [1], [0, 0, 1, 1], [], []>} : vector<8x40xf32>, vector<40x64xf32>, vector<8x64xf32> -> vector<8x64xf32>
    %14 = arith.addf %8, %13 : vector<8x64xf32>
    %c0_18 = arith.constant 0 : index
    %c0_19 = arith.constant 0 : index
    %c2 = arith.constant 2 : index
    %c0_20 = arith.constant 0 : index
    %15 = vector.load %arg3[%c0_18, %c0_19, %c2, %c0_20] : memref<1x1x10x40xf32, #tpu.memory_space<vmem>>, vector<1x1x8x40xf32>
    %16 = vector.shape_cast %15 : vector<1x1x8x40xf32> to vector<8x40xf32>
    %c0_21 = arith.constant 0 : index
    %c2_22 = arith.constant 2 : index
    %c0_23 = arith.constant 0 : index
    %c0_24 = arith.constant 0 : index
    %17 = vector.load %arg4[%c0_21, %c2_22, %c0_23, %c0_24] : memref<1x3x40x64xf32, #tpu.memory_space<vmem>>, vector<1x1x40x64xf32>
    %18 = vector.shape_cast %17 : vector<1x1x40x64xf32> to vector<40x64xf32>
    %cst_25 = arith.constant dense<0.000000e+00> : vector<8x64xf32>
    %19 = tpu.matmul %16, %18, %cst_25 {dimension_numbers = #tpu.dot_dimension_numbers<[1], [0], [0], [1], [0, 0, 1, 1], [], []>} : vector<8x40xf32>, vector<40x64xf32>, vector<8x64xf32> -> vector<8x64xf32>
    %20 = arith.addf %14, %19 : vector<8x64xf32>
    %21 = arith.addf %3, %20 : vector<8x64xf32>
    %c0_26 = arith.constant 0 : index
    %c0_27 = arith.constant 0 : index
    %22 = vector.load %arg8[%c0_26, %c0_27] : memref<8x64xf32, #tpu.memory_space<vmem>>, vector<8x64xf32>
    tpu.vector_store %arg8[%c0_26, %c0_27], %21 {strides = array<i32>} : memref<8x64xf32, #tpu.memory_space<vmem>>, vector<8x64xf32>,
    %c2_i32 = arith.constant 2 : i32
    %23 = arith.cmpi eq, %arg2, %c2_i32 : i32
    %24 = arith.extui %23 : i1 to i32
    %c0_i32_28 = arith.constant 0 : i32
    %25 = arith.cmpi ne, %24, %c0_i32_28 : i32
    scf.if %25 {
      %c0_29 = arith.constant 0 : index
      %c0_30 = arith.constant 0 : index
      %26 = vector.load %arg8[%c0_29, %c0_30] : memref<8x64xf32, #tpu.memory_space<vmem>>, vector<8x64xf32>
      %c0_31 = arith.constant 0 : index
      %c0_32 = arith.constant 0 : index
      %c0_33 = arith.constant 0 : index
      %c0_34 = arith.constant 0 : index
      %27 = vector.load %arg5[%c0_31, %c0_32, %c0_33, %c0_34] : memref<1x1x8x64xf32, #tpu.memory_space<vmem>>, vector<1x1x8x64xf32>
      %28 = vector.shape_cast %27 : vector<1x1x8x64xf32> to vector<8x64xf32>
      %29 = vector.shape_cast %26 : vector<8x64xf32> to vector<1x1x8x64xf32>
      tpu.vector_store %arg5[%c0_31, %c0_32, %c0_33, %c0_34], %29 {strides = array<i32>} : memref<1x1x8x64xf32, #tpu.memory_space<vmem>>, vector<1x1x8x64xf32>,
      %cst_35 = arith.constant dense<0.000000e+00> : vector<64xf32>
      %30 = vector.multi_reduction <add>, %26, %cst_35 [0] : vector<8x64xf32> to vector<64xf32>
      %31 = vector.shape_cast %30 : vector<64xf32> to vector<1x64xf32>
      %c0_36 = arith.constant 0 : index
      %c0_37 = arith.constant 0 : index
      %c0_38 = arith.constant 0 : index
      %c0_39 = arith.constant 0 : index
      %32 = vector.load %arg6[%c0_36, %c0_37, %c0_38, %c0_39] : memref<1x1x1x64xf32, #tpu.memory_space<vmem>>, vector<1x1x1x64xf32>
      %33 = vector.shape_cast %32 : vector<1x1x1x64xf32> to vector<1x64xf32>
      %34 = vector.shape_cast %31 : vector<1x64xf32> to vector<1x1x1x64xf32>
      tpu.vector_store %arg6[%c0_36, %c0_37, %c0_38, %c0_39], %34 {strides = array<i32>} : memref<1x1x1x64xf32, #tpu.memory_space<vmem>>, vector<1x1x1x64xf32>,
      %35 = arith.mulf %26, %26 : vector<8x64xf32>
      %cst_40 = arith.constant dense<0.000000e+00> : vector<64xf32>
      %36 = vector.multi_reduction <add>, %35, %cst_40 [0] : vector<8x64xf32> to vector<64xf32>
      %37 = vector.shape_cast %36 : vector<64xf32> to vector<1x64xf32>
      %c0_41 = arith.constant 0 : index
      %c0_42 = arith.constant 0 : index
      %c0_43 = arith.constant 0 : index
      %c0_44 = arith.constant 0 : index
      %38 = vector.load %arg7[%c0_41, %c0_42, %c0_43, %c0_44] : memref<1x1x1x64xf32, #tpu.memory_space<vmem>>, vector<1x1x1x64xf32>
      %39 = vector.shape_cast %38 : vector<1x1x1x64xf32> to vector<1x64xf32>
      %40 = vector.shape_cast %37 : vector<1x64xf32> to vector<1x1x1x64xf32>
      tpu.vector_store %arg7[%c0_41, %c0_42, %c0_43, %c0_44], %40 {strides = array<i32>} : memref<1x1x1x64xf32, #tpu.memory_space<vmem>>, vector<1x1x1x64xf32>,
    } else {
    }
    return
  }
  func.func @transform_0(%arg0: i32, %arg1: i32, %arg2: i32) -> (i32, i32, i32, i32) {
    %0 = arith.addi %arg1, %arg2 : i32
    %c0_i32 = arith.constant 0 : i32
    %c0_i32_0 = arith.constant 0 : i32
    %c0_i32_1 = arith.constant 0 : i32
    return %arg0, %0, %c0_i32, %c0_i32_0 : i32, i32, i32, i32
  }
  func.func @transform_1(%arg0: i32, %arg1: i32, %arg2: i32) -> (i32, i32, i32, i32) {
    %c0_i32 = arith.constant 0 : i32
    %c0_i32_0 = arith.constant 0 : i32
    %c0_i32_1 = arith.constant 0 : i32
    %c0_i32_2 = arith.constant 0 : i32
    return %arg2, %c0_i32, %c0_i32_0, %c0_i32_1 : i32, i32, i32, i32
  }
  func.func @transform_2(%arg0: i32, %arg1: i32, %arg2: i32) -> (i32, i32, i32, i32) {
    %c0_i32 = arith.constant 0 : i32
    %c0_i32_0 = arith.constant 0 : i32
    %c0_i32_1 = arith.constant 0 : i32
    return %arg0, %arg1, %c0_i32, %c0_i32_0 : i32, i32, i32, i32
  }
  func.func @transform_3(%arg0: i32, %arg1: i32, %arg2: i32) -> (i32, i32, i32, i32) {
    %c0_i32 = arith.constant 0 : i32
    %c0_i32_0 = arith.constant 0 : i32
    %c0_i32_1 = arith.constant 0 : i32
    return %arg0, %arg1, %c0_i32, %c0_i32_0 : i32, i32, i32, i32
  }
  func.func @transform_4(%arg0: i32, %arg1: i32, %arg2: i32) -> (i32, i32, i32, i32) {
    %c0_i32 = arith.constant 0 : i32
    %c0_i32_0 = arith.constant 0 : i32
    %c0_i32_1 = arith.constant 0 : i32
    return %arg0, %arg1, %c0_i32, %c0_i32_0 : i32, i32, i32, i32
  }
}

module attributes {stable_mosaic.version = 11 : i64} {
  func.func @_bn_relu_kernel(%arg0: i32, %arg1: memref<8x1024xf32, #tpu.memory_space<vmem>>, %arg2: memref<1x1024xf32, #tpu.memory_space<vmem>>, %arg3: memref<1x1024xf32, #tpu.memory_space<vmem>>, %arg4: memref<8x1024xf32, #tpu.memory_space<vmem>>) attributes {dimension_semantics = [#tpu.dimension_semantics<parallel>], iteration_bounds = array<i64: 1>, scalar_prefetch = 0 : i64, scratch_operands = 0 : i64, tpu.core_type = #tpu.core_type<tc>, window_params = [{transform_indices = @transform_0, window_bounds = array<i64: 8, 1024>}, {pipeline_mode = #tpu.pipeline_mode<synchronous>, transform_indices = @transform_1, window_bounds = array<i64: 1, 1024>}, {pipeline_mode = #tpu.pipeline_mode<synchronous>, transform_indices = @transform_2, window_bounds = array<i64: 1, 1024>}, {transform_indices = @transform_3, window_bounds = array<i64: 8, 1024>}]} {
    %c0 = arith.constant 0 : index
    %c0_0 = arith.constant 0 : index
    %0 = vector.load %arg1[%c0, %c0_0] : memref<8x1024xf32, #tpu.memory_space<vmem>>, vector<8x1024xf32>
    %c0_1 = arith.constant 0 : index
    %c0_2 = arith.constant 0 : index
    %1 = vector.load %arg2[%c0_1, %c0_2] : memref<1x1024xf32, #tpu.memory_space<vmem>>, vector<1x1024xf32>
    %2 = vector.broadcast %1 : vector<1x1024xf32> to vector<8x1024xf32>
    %3 = arith.mulf %0, %2 : vector<8x1024xf32>
    %c0_3 = arith.constant 0 : index
    %c0_4 = arith.constant 0 : index
    %4 = vector.load %arg3[%c0_3, %c0_4] : memref<1x1024xf32, #tpu.memory_space<vmem>>, vector<1x1024xf32>
    %5 = vector.broadcast %4 : vector<1x1024xf32> to vector<8x1024xf32>
    %6 = arith.addf %3, %5 : vector<8x1024xf32>
    %cst = arith.constant 0.000000e+00 : f32
    %7 = vector.broadcast %cst : f32 to vector<8x1024xf32>
    %8 = arith.maximumf %6, %7 : vector<8x1024xf32>
    %c0_5 = arith.constant 0 : index
    %c0_6 = arith.constant 0 : index
    %9 = vector.load %arg4[%c0_5, %c0_6] : memref<8x1024xf32, #tpu.memory_space<vmem>>, vector<8x1024xf32>
    tpu.vector_store %arg4[%c0_5, %c0_6], %8 {strides = array<i32>} : memref<8x1024xf32, #tpu.memory_space<vmem>>, vector<8x1024xf32>,
    return
  }
  func.func @transform_0(%arg0: i32) -> (i32, i32) {
    %c0_i32 = arith.constant 0 : i32
    %c0_i32_0 = arith.constant 0 : i32
    return %arg0, %c0_i32 : i32, i32
  }
  func.func @transform_1(%arg0: i32) -> (i32, i32) {
    %c0_i32 = arith.constant 0 : i32
    %c0_i32_0 = arith.constant 0 : i32
    %c0_i32_1 = arith.constant 0 : i32
    return %c0_i32, %c0_i32_0 : i32, i32
  }
  func.func @transform_2(%arg0: i32) -> (i32, i32) {
    %c0_i32 = arith.constant 0 : i32
    %c0_i32_0 = arith.constant 0 : i32
    %c0_i32_1 = arith.constant 0 : i32
    return %c0_i32, %c0_i32_0 : i32, i32
  }
  func.func @transform_3(%arg0: i32) -> (i32, i32) {
    %c0_i32 = arith.constant 0 : i32
    %c0_i32_0 = arith.constant 0 : i32
    return %arg0, %c0_i32 : i32, i32
  }
}

module attributes {stable_mosaic.version = 11 : i64} {
  func.func @_conv_plane_kernel(%arg0: i32, %arg1: i32, %arg2: i32, %arg3: memref<1x1x10x80xf32, #tpu.memory_space<vmem>>, %arg4: memref<1x3x80x64xf32, #tpu.memory_space<vmem>>, %arg5: memref<1x1x8x64xf32, #tpu.memory_space<vmem>>, %arg6: memref<1x1x1x64xf32, #tpu.memory_space<vmem>>, %arg7: memref<1x1x1x64xf32, #tpu.memory_space<vmem>>, %arg8: memref<8x64xf32, #tpu.memory_space<vmem>>) attributes {dimension_semantics = [#tpu.dimension_semantics<parallel>, #tpu.dimension_semantics<parallel>, #tpu.dimension_semantics<arbitrary>], iteration_bounds = array<i64: 2, 8, 3>, scalar_prefetch = 0 : i64, scratch_operands = 1 : i64, tpu.core_type = #tpu.core_type<tc>, window_params = [{transform_indices = @transform_0, window_bounds = array<i64: 1, 1, 10, 80>}, {transform_indices = @transform_1, window_bounds = array<i64: 1, 3, 80, 64>}, {transform_indices = @transform_2, window_bounds = array<i64: 1, 1, 8, 64>}, {transform_indices = @transform_3, window_bounds = array<i64: 1, 1, 1, 64>}, {transform_indices = @transform_4, window_bounds = array<i64: 1, 1, 1, 64>}]} {
    %c0_i32 = arith.constant 0 : i32
    %0 = arith.cmpi eq, %arg2, %c0_i32 : i32
    %1 = arith.extui %0 : i1 to i32
    %c0_i32_0 = arith.constant 0 : i32
    %2 = arith.cmpi ne, %1, %c0_i32_0 : i32
    scf.if %2 {
      %cst_29 = arith.constant 0.000000e+00 : f32
      %26 = vector.broadcast %cst_29 : f32 to vector<8x64xf32>
      %c0_30 = arith.constant 0 : index
      %c0_31 = arith.constant 0 : index
      %27 = vector.load %arg8[%c0_30, %c0_31] : memref<8x64xf32, #tpu.memory_space<vmem>>, vector<8x64xf32>
      tpu.vector_store %arg8[%c0_30, %c0_31], %26 {strides = array<i32>} : memref<8x64xf32, #tpu.memory_space<vmem>>, vector<8x64xf32>,
    } else {
    }
    %c0 = arith.constant 0 : index
    %c0_1 = arith.constant 0 : index
    %3 = vector.load %arg8[%c0, %c0_1] : memref<8x64xf32, #tpu.memory_space<vmem>>, vector<8x64xf32>
    %c0_2 = arith.constant 0 : index
    %c0_3 = arith.constant 0 : index
    %c0_4 = arith.constant 0 : index
    %c0_5 = arith.constant 0 : index
    %4 = vector.load %arg3[%c0_2, %c0_3, %c0_4, %c0_5] : memref<1x1x10x80xf32, #tpu.memory_space<vmem>>, vector<1x1x8x80xf32>
    %5 = vector.shape_cast %4 : vector<1x1x8x80xf32> to vector<8x80xf32>
    %c0_6 = arith.constant 0 : index
    %c0_7 = arith.constant 0 : index
    %c0_8 = arith.constant 0 : index
    %c0_9 = arith.constant 0 : index
    %6 = vector.load %arg4[%c0_6, %c0_7, %c0_8, %c0_9] : memref<1x3x80x64xf32, #tpu.memory_space<vmem>>, vector<1x1x80x64xf32>
    %7 = vector.shape_cast %6 : vector<1x1x80x64xf32> to vector<80x64xf32>
    %cst = arith.constant dense<0.000000e+00> : vector<8x64xf32>
    %8 = tpu.matmul %5, %7, %cst {dimension_numbers = #tpu.dot_dimension_numbers<[1], [0], [0], [1], [0, 0, 1, 1], [], []>} : vector<8x80xf32>, vector<80x64xf32>, vector<8x64xf32> -> vector<8x64xf32>
    %c0_10 = arith.constant 0 : index
    %c0_11 = arith.constant 0 : index
    %c1 = arith.constant 1 : index
    %c0_12 = arith.constant 0 : index
    %9 = vector.load %arg3[%c0_10, %c0_11, %c1, %c0_12] : memref<1x1x10x80xf32, #tpu.memory_space<vmem>>, vector<1x1x8x80xf32>
    %10 = vector.shape_cast %9 : vector<1x1x8x80xf32> to vector<8x80xf32>
    %c0_13 = arith.constant 0 : index
    %c1_14 = arith.constant 1 : index
    %c0_15 = arith.constant 0 : index
    %c0_16 = arith.constant 0 : index
    %11 = vector.load %arg4[%c0_13, %c1_14, %c0_15, %c0_16] : memref<1x3x80x64xf32, #tpu.memory_space<vmem>>, vector<1x1x80x64xf32>
    %12 = vector.shape_cast %11 : vector<1x1x80x64xf32> to vector<80x64xf32>
    %cst_17 = arith.constant dense<0.000000e+00> : vector<8x64xf32>
    %13 = tpu.matmul %10, %12, %cst_17 {dimension_numbers = #tpu.dot_dimension_numbers<[1], [0], [0], [1], [0, 0, 1, 1], [], []>} : vector<8x80xf32>, vector<80x64xf32>, vector<8x64xf32> -> vector<8x64xf32>
    %14 = arith.addf %8, %13 : vector<8x64xf32>
    %c0_18 = arith.constant 0 : index
    %c0_19 = arith.constant 0 : index
    %c2 = arith.constant 2 : index
    %c0_20 = arith.constant 0 : index
    %15 = vector.load %arg3[%c0_18, %c0_19, %c2, %c0_20] : memref<1x1x10x80xf32, #tpu.memory_space<vmem>>, vector<1x1x8x80xf32>
    %16 = vector.shape_cast %15 : vector<1x1x8x80xf32> to vector<8x80xf32>
    %c0_21 = arith.constant 0 : index
    %c2_22 = arith.constant 2 : index
    %c0_23 = arith.constant 0 : index
    %c0_24 = arith.constant 0 : index
    %17 = vector.load %arg4[%c0_21, %c2_22, %c0_23, %c0_24] : memref<1x3x80x64xf32, #tpu.memory_space<vmem>>, vector<1x1x80x64xf32>
    %18 = vector.shape_cast %17 : vector<1x1x80x64xf32> to vector<80x64xf32>
    %cst_25 = arith.constant dense<0.000000e+00> : vector<8x64xf32>
    %19 = tpu.matmul %16, %18, %cst_25 {dimension_numbers = #tpu.dot_dimension_numbers<[1], [0], [0], [1], [0, 0, 1, 1], [], []>} : vector<8x80xf32>, vector<80x64xf32>, vector<8x64xf32> -> vector<8x64xf32>
    %20 = arith.addf %14, %19 : vector<8x64xf32>
    %21 = arith.addf %3, %20 : vector<8x64xf32>
    %c0_26 = arith.constant 0 : index
    %c0_27 = arith.constant 0 : index
    %22 = vector.load %arg8[%c0_26, %c0_27] : memref<8x64xf32, #tpu.memory_space<vmem>>, vector<8x64xf32>
    tpu.vector_store %arg8[%c0_26, %c0_27], %21 {strides = array<i32>} : memref<8x64xf32, #tpu.memory_space<vmem>>, vector<8x64xf32>,
    %c2_i32 = arith.constant 2 : i32
    %23 = arith.cmpi eq, %arg2, %c2_i32 : i32
    %24 = arith.extui %23 : i1 to i32
    %c0_i32_28 = arith.constant 0 : i32
    %25 = arith.cmpi ne, %24, %c0_i32_28 : i32
    scf.if %25 {
      %c0_29 = arith.constant 0 : index
      %c0_30 = arith.constant 0 : index
      %26 = vector.load %arg8[%c0_29, %c0_30] : memref<8x64xf32, #tpu.memory_space<vmem>>, vector<8x64xf32>
      %c0_31 = arith.constant 0 : index
      %c0_32 = arith.constant 0 : index
      %c0_33 = arith.constant 0 : index
      %c0_34 = arith.constant 0 : index
      %27 = vector.load %arg5[%c0_31, %c0_32, %c0_33, %c0_34] : memref<1x1x8x64xf32, #tpu.memory_space<vmem>>, vector<1x1x8x64xf32>
      %28 = vector.shape_cast %27 : vector<1x1x8x64xf32> to vector<8x64xf32>
      %29 = vector.shape_cast %26 : vector<8x64xf32> to vector<1x1x8x64xf32>
      tpu.vector_store %arg5[%c0_31, %c0_32, %c0_33, %c0_34], %29 {strides = array<i32>} : memref<1x1x8x64xf32, #tpu.memory_space<vmem>>, vector<1x1x8x64xf32>,
      %cst_35 = arith.constant dense<0.000000e+00> : vector<64xf32>
      %30 = vector.multi_reduction <add>, %26, %cst_35 [0] : vector<8x64xf32> to vector<64xf32>
      %31 = vector.shape_cast %30 : vector<64xf32> to vector<1x64xf32>
      %c0_36 = arith.constant 0 : index
      %c0_37 = arith.constant 0 : index
      %c0_38 = arith.constant 0 : index
      %c0_39 = arith.constant 0 : index
      %32 = vector.load %arg6[%c0_36, %c0_37, %c0_38, %c0_39] : memref<1x1x1x64xf32, #tpu.memory_space<vmem>>, vector<1x1x1x64xf32>
      %33 = vector.shape_cast %32 : vector<1x1x1x64xf32> to vector<1x64xf32>
      %34 = vector.shape_cast %31 : vector<1x64xf32> to vector<1x1x1x64xf32>
      tpu.vector_store %arg6[%c0_36, %c0_37, %c0_38, %c0_39], %34 {strides = array<i32>} : memref<1x1x1x64xf32, #tpu.memory_space<vmem>>, vector<1x1x1x64xf32>,
      %35 = arith.mulf %26, %26 : vector<8x64xf32>
      %cst_40 = arith.constant dense<0.000000e+00> : vector<64xf32>
      %36 = vector.multi_reduction <add>, %35, %cst_40 [0] : vector<8x64xf32> to vector<64xf32>
      %37 = vector.shape_cast %36 : vector<64xf32> to vector<1x64xf32>
      %c0_41 = arith.constant 0 : index
      %c0_42 = arith.constant 0 : index
      %c0_43 = arith.constant 0 : index
      %c0_44 = arith.constant 0 : index
      %38 = vector.load %arg7[%c0_41, %c0_42, %c0_43, %c0_44] : memref<1x1x1x64xf32, #tpu.memory_space<vmem>>, vector<1x1x1x64xf32>
      %39 = vector.shape_cast %38 : vector<1x1x1x64xf32> to vector<1x64xf32>
      %40 = vector.shape_cast %37 : vector<1x64xf32> to vector<1x1x1x64xf32>
      tpu.vector_store %arg7[%c0_41, %c0_42, %c0_43, %c0_44], %40 {strides = array<i32>} : memref<1x1x1x64xf32, #tpu.memory_space<vmem>>, vector<1x1x1x64xf32>,
    } else {
    }
    return
  }
  func.func @transform_0(%arg0: i32, %arg1: i32, %arg2: i32) -> (i32, i32, i32, i32) {
    %0 = arith.addi %arg1, %arg2 : i32
    %c0_i32 = arith.constant 0 : i32
    %c0_i32_0 = arith.constant 0 : i32
    %c0_i32_1 = arith.constant 0 : i32
    return %arg0, %0, %c0_i32, %c0_i32_0 : i32, i32, i32, i32
  }
  func.func @transform_1(%arg0: i32, %arg1: i32, %arg2: i32) -> (i32, i32, i32, i32) {
    %c0_i32 = arith.constant 0 : i32
    %c0_i32_0 = arith.constant 0 : i32
    %c0_i32_1 = arith.constant 0 : i32
    %c0_i32_2 = arith.constant 0 : i32
    return %arg2, %c0_i32, %c0_i32_0, %c0_i32_1 : i32, i32, i32, i32
  }
  func.func @transform_2(%arg0: i32, %arg1: i32, %arg2: i32) -> (i32, i32, i32, i32) {
    %c0_i32 = arith.constant 0 : i32
    %c0_i32_0 = arith.constant 0 : i32
    %c0_i32_1 = arith.constant 0 : i32
    return %arg0, %arg1, %c0_i32, %c0_i32_0 : i32, i32, i32, i32
  }
  func.func @transform_3(%arg0: i32, %arg1: i32, %arg2: i32) -> (i32, i32, i32, i32) {
    %c0_i32 = arith.constant 0 : i32
    %c0_i32_0 = arith.constant 0 : i32
    %c0_i32_1 = arith.constant 0 : i32
    return %arg0, %arg1, %c0_i32, %c0_i32_0 : i32, i32, i32, i32
  }
  func.func @transform_4(%arg0: i32, %arg1: i32, %arg2: i32) -> (i32, i32, i32, i32) {
    %c0_i32 = arith.constant 0 : i32
    %c0_i32_0 = arith.constant 0 : i32
    %c0_i32_1 = arith.constant 0 : i32
    return %arg0, %arg1, %c0_i32, %c0_i32_0 : i32, i32, i32, i32
  }
}

</mosaic_0001>

<llo_original>
// kernel: unet_layer.4
$region0: #{unet_layer.4}
  #allocation0 [shape = 'u32[]', space=smem, size = 0x4, offset = 0x4, fixed_abs, tag = 'smem constant byte address 0x4 - core index']
  #allocation1 [shape = 'u32[144,128]{1,0:T(1,128)}', space=vmem, size = 0x12000, scoped, tag = 'internal scratch']
  #allocation2 [shape = 'f32[8,64]{1,0:T(8,128)}', space=vmem, size = 0x1000, scoped, tag = 'scratch operand']
  %s0 = inlined_call_operand.vmem [shape: f32[2,10,10,40], index: 0, kind: input, shape index: {}]
  %s1 = inlined_call_operand.vmem [shape: f32[3,3,40,64], index: 1, kind: input, shape index: {}]
  %s2 = inlined_call_operand.vmem [shape: f32[2,8,8,64], index: 2, kind: output, shape index: {0}]
  %s3 = inlined_call_operand.vmem [shape: f32[2,8,1,64], index: 3, kind: output, shape index: {1}]
  %s4 = inlined_call_operand.vmem [shape: f32[2,8,1,64], index: 4, kind: output, shape index: {2}]
  %5 = xla_tuple %s2, %s3, %s4
  %s6 = sld [smem:[#allocation0]]
  $region65: #{unet_layer.4} parent=0
    _
  %s8 = ssub.s32 1, %s6
  %s9 = scalar_select 0, %s8, %s6
  loop: start=0, step=1, limit=50
  $region2: #{unet_layer.4} parent=0 // loop_pre_header
    _
  $region3: #{unet_layer.4} parent=0 // loop_header
    %s11 = sphi 0, %s15
    %p12 = scmp.ge.s32.totalorder %s11, 50
    %s18 = sphi 0, %s37
    %s19 = sphi 0, %s33
    %s20 = sphi 0, %s29
    %s21 = sphi 0, %s18
    %s22 = sphi 0, %s19
    %s23 = sphi 0, %s20
    %s24 = sphi 0, %s21
    %s25 = sphi 0, %s22
    %s26 = sphi 0, %s23
    %s44 = sphi 0, %s46
    %s47 = sphi 0, %s44
    %s48 = sphi 0, %s47
    %s64 = sphi 0, %s48
    %s70 = sphi 0, %s72
    %s73 = sphi 0, %s70
    %s74 = sphi 0, %s73
    %s90 = sphi 0, %s74
    %s98 = sphi 0, %s100
    %s101 = sphi 0, %s98
    %s102 = sphi 0, %s101
    %s118 = sphi 0, %s102
    %s126 = sphi 0, %s128
    %s129 = sphi 0, %s126
    %s130 = sphi 0, %s129
    %s146 = sphi 0, %s130
    %s154 = sphi 0, %s156
    %s157 = sphi 0, %s154
    %s158 = sphi 0, %s157
    %s174 = sphi 0, %s158
  $region4: #{unet_layer.4} parent=0 // loop_header_branch
    %14 = sbr.rel (%p12) target = $region8
  $region5: #{unet_layer.4} parent=0 // loop_body
    %s16 = ssub.s32 %s11, 1
    %s17 = ssub.s32 %s11, 2
    %s27 = sadd.s32 1, %s20
    %p28 = scmp.ge.s32.totalorder %s27, 3
    %s29 = scalar_select %p28, 0, %s27
    %s30 = sadd.s32 1, %s19
    %s31 = scalar_select %p28, %s30, %s19
    %p32 = scmp.ge.s32.totalorder %s31, 8
    %s33 = scalar_select %p32, 0, %s31
    %s34 = sadd.s32 1, %s18
    %s35 = scalar_select %p32, %s34, %s18
    %p36 = scmp.ge.s32.totalorder %s35, 2
    %s37 = scalar_select %p36, 0, %s35
    %s38 = sadd.s32 %s19, %s20
    %s39 = sadd.s32 %s33, %s29
    %s40 = ssub.s32 %s18, %s37
    %s41 = ssub.s32 %s38, %s39
    %s42 = sor.u32 %s40, %s41
    %p43 = scmp.eq.s32.totalorder %s42, 0
    %s45 = sadd.s32 %s44, 1
    %s46 = scalar_select %p43, %s44, %s45
    %p49 = pneg %p43
    %p50 = scmp.eq.s32.totalorder %s11, 47
    %p51 = por %p49, %p50
    %p52 = scmp.ne.s32.totalorder %s44, %s47
    %p53 = scmp.eq.s32.totalorder %s11, 0
    %p54 = por %p52, %p53
    %p55 = scmp.ne.s32.totalorder %s44, %s47
    %p56 = scmp.eq.s32.totalorder %s16, 47
    %p57 = por %p55, %p56
    %p58 = scmp.ne.s32.totalorder %s47, %s48
    %p59 = scmp.eq.s32.totalorder %s16, 0
    %p60 = por %p58, %p59
    %p61 = scmp.ne.s32.totalorder %s47, %s48
    %p62 = scmp.eq.s32.totalorder %s17, 47
    %p63 = por %p61, %p62
    %p65 = scmp.ne.s32.totalorder %s48, %s64
    %p66 = scmp.eq.s32.totalorder %s17, 0
    %p67 = por %p65, %p66
    %s68 = ssub.s32 %s20, %s29
    %p69 = scmp.eq.s32.totalorder %s68, 0
    %s71 = sadd.s32 %s70, 1
    %s72 = scalar_select %p69, %s70, %s71
    %p75 = pneg %p69
    %p76 = scmp.eq.s32.totalorder %s11, 47
    %p77 = por %p75, %p76
    %p78 = scmp.ne.s32.totalorder %s70, %s73
    %p79 = scmp.eq.s32.totalorder %s11, 0
    %p80 = por %p78, %p79
    %p81 = scmp.ne.s32.totalorder %s70, %s73
    %p82 = scmp.eq.s32.totalorder %s16, 47
    %p83 = por %p81, %p82
    %p84 = scmp.ne.s32.totalorder %s73, %s74
    %p85 = scmp.eq.s32.totalorder %s16, 0
    %p86 = por %p84, %p85
    %p87 = scmp.ne.s32.totalorder %s73, %s74
    %p88 = scmp.eq.s32.totalorder %s17, 47
    %p89 = por %p87, %p88
    %p91 = scmp.ne.s32.totalorder %s74, %s90
    %p92 = scmp.eq.s32.totalorder %s17, 0
    %p93 = por %p91, %p92
    %s94 = ssub.s32 %s18, %s37
    %s95 = ssub.s32 %s19, %s33
    %s96 = sor.u32 %s94, %s95
    %p97 = scmp.eq.s32.totalorder %s96, 0
    %s99 = sadd.s32 %s98, 1
    %s100 = scalar_select %p97, %s98, %s99
    %p103 = pneg %p97
    %p104 = scmp.eq.s32.totalorder %s11, 47
    %p105 = por %p103, %p104
    %p106 = scmp.ne.s32.totalorder %s98, %s101
    %p107 = scmp.eq.s32.totalorder %s11, 0
    %p108 = por %p106, %p107
    %p109 = scmp.ne.s32.totalorder %s98, %s101
    %p110 = scmp.eq.s32.totalorder %s16, 47
    %p111 = por %p109, %p110
    %p112 = scmp.ne.s32.totalorder %s101, %s102
    %p113 = scmp.eq.s32.totalorder %s16, 0
    %p114 = por %p112, %p113
    %p115 = scmp.ne.s32.totalorder %s101, %s102
    %p116 = scmp.eq.s32.totalorder %s17, 47
    %p117 = por %p115, %p116
    %p119 = scmp.ne.s32.totalorder %s102, %s118
    %p120 = scmp.eq.s32.totalorder %s17, 0
    %p121 = por %p119, %p120
    %s122 = ssub.s32 %s18, %s37
    %s123 = ssub.s32 %s19, %s33
    %s124 = sor.u32 %s122, %s123
    %p125 = scmp.eq.s32.totalorder %s124, 0
    %s127 = sadd.s32 %s126, 1
    %s128 = scalar_select %p125, %s126, %s127
    %p131 = pneg %p125
    %p132 = scmp.eq.s32.totalorder %s11, 47
    %p133 = por %p131, %p132
    %p134 = scmp.ne.s32.totalorder %s126, %s129
    %p135 = scmp.eq.s32.totalorder %s11, 0
    %p136 = por %p134, %p135
    %p137 = scmp.ne.s32.totalorder %s126, %s129
    %p138 = scmp.eq.s32.totalorder %s16, 47
    %p139 = por %p137, %p138
    %p140 = scmp.ne.s32.totalorder %s129, %s130
    %p141 = scmp.eq.s32.totalorder %s16, 0
    %p142 = por %p140, %p141
    %p143 = scmp.ne.s32.totalorder %s129, %s130
    %p144 = scmp.eq.s32.totalorder %s17, 47
    %p145 = por %p143, %p144
    %p147 = scmp.ne.s32.totalorder %s130, %s146
    %p148 = scmp.eq.s32.totalorder %s17, 0
    %p149 = por %p147, %p148
    %s150 = ssub.s32 %s18, %s37
    %s151 = ssub.s32 %s19, %s33
    %s152 = sor.u32 %s150, %s151
    %p153 = scmp.eq.s32.totalorder %s152, 0
    %s155 = sadd.s32 %s154, 1
    %s156 = scalar_select %p153, %s154, %s155
    %p159 = pneg %p153
    %p160 = scmp.eq.s32.totalorder %s11, 47
    %p161 = por %p159, %p160
    %p162 = scmp.ne.s32.totalorder %s154, %s157
    %p163 = scmp.eq.s32.totalorder %s11, 0
    %p164 = por %p162, %p163
    %p165 = scmp.ne.s32.totalorder %s154, %s157
    %p166 = scmp.eq.s32.totalorder %s16, 47
    %p167 = por %p165, %p166
    %p168 = scmp.ne.s32.totalorder %s157, %s158
    %p169 = scmp.eq.s32.totalorder %s16, 0
    %p170 = por %p168, %p169
    %p171 = scmp.ne.s32.totalorder %s157, %s158
    %p172 = scmp.eq.s32.totalorder %s17, 47
    %p173 = por %p171, %p172
    %p175 = scmp.ne.s32.totalorder %s158, %s174
    %p176 = scmp.eq.s32.totalorder %s17, 0
    %p177 = por %p175, %p176
    %p178 = scmp.le.s32.totalorder 1, %s11
    %p179 = scmp.lt.s32.totalorder %s11, 49
    %p180 = pnand %p178, %p179
    %p181 = pneg %p180
    // Predicated region
    $region9: #{unet_layer.4} parent=5 // pred_check
      _
    $region10: #{unet_layer.4} parent=5 // pred_check_branch
      %183 = sbr.rel (%p180) target = $region12
    $region11: #{unet_layer.4} parent=5 // pred_region
      %s184 = ssub.s32 %s11, 1
    $region12: #{unet_layer.4} parent=5 // pred_fallthru
      _
    %p185 = scmp.lt.s32.totalorder %s11, 48
    // Predicated region
    $region13: #{unet_layer.4} parent=5 // pred_check
      %p186 = pneg %p185
    $region14: #{unet_layer.4} parent=5 // pred_check_branch
      %188 = sbr.rel (%p186) target = $region16
    $region15: #{unet_layer.4} parent=5 // pred_region
      // Predicated region
      $region17: #{unet_layer.4} parent=15 // pred_check
        %p189 = pneg %p54
      $region18: #{unet_layer.4} parent=15 // pred_check_branch
        %191 = sbr.rel (%p189) target = $region20
      $region19: #{unet_layer.4} parent=15 // pred_region
        %s192 = sadd.s32 %s19, %s20
        %p193 = scmp.lt.s32.totalorder %s18, 1
        %s194 = scalar_select %p193, %s18, 1
        %p195 = scmp.lt.s32.totalorder %s192, 9
        %s196 = scalar_select %p195, %s192, 9
        %s197 = smul.addr %s196, 2
        %s198 = smul.addr %s194, 20
        %s199 = sadd.s32 %s197, %s198
        %s200 = smul.addr %s199, 8
        %s201 = scalar_lea.vmem %s0, %s200
        %s202 = sadd.s32 %s19, %s20
      $region20: #{unet_layer.4} parent=15 // pred_fallthru
        _
      // Predicated region
      $region21: #{unet_layer.4} parent=15 // pred_check
        %p203 = pneg %p80
      $region22: #{unet_layer.4} parent=15 // pred_check_branch
        %205 = sbr.rel (%p203) target = $region24
      $region23: #{unet_layer.4} parent=15 // pred_region
        %p206 = scmp.lt.s32.totalorder %s20, 2
        %s207 = scalar_select %p206, %s20, 2
        %s208 = smul.addr %s207, 15
        %s209 = smul.addr %s208, 8
        %s210 = scalar_lea.vmem %s1, %s209
      $region24: #{unet_layer.4} parent=15 // pred_fallthru
        _
    $region16: #{unet_layer.4} parent=5 // pred_fallthru
      _
    %p211 = scmp.le.s32.totalorder 1, %s11
    %p212 = scmp.lt.s32.totalorder %s11, 49
    %p213 = pnand %p211, %p212
    %p214 = pneg %p213
    // Predicated region
    $region25: #{unet_layer.4} parent=5 // pred_check
      _
    $region26: #{unet_layer.4} parent=5 // pred_check_branch
      %216 = sbr.rel (%p213) target = $region28
    $region27: #{unet_layer.4} parent=5 // pred_region
      %s217 = ssub.s32 %s11, 1
      %s218 = sadd.s32 %s22, %s23
      %p219 = scmp.lt.s32.totalorder %s21, 1
      %s220 = scalar_select %p219, %s21, 1
      %p221 = scmp.lt.s32.totalorder %s218, 9
      %s222 = scalar_select %p221, %s218, 9
      %s223 = smul.addr %s222, 2
      %s224 = smul.addr %s220, 20
      %s225 = sadd.s32 %s223, %s224
      %s226 = smul.addr %s225, 8
      %s227 = scalar_lea.vmem %s0, %s226
      %p228 = pneg %p60
      %p229 = pneg %p57
      %p230 = scmp.lt.s32.totalorder %s23, 2
      %s231 = scalar_select %p230, %s23, 2
      %s232 = smul.addr %s231, 15
      %s233 = smul.addr %s232, 8
      %s234 = scalar_lea.vmem %s1, %s233
      %p235 = pneg %p86
      %p236 = pneg %p83
      %p237 = pneg %p114
      %p238 = pneg %p111
      %p239 = scmp.lt.s32.totalorder %s21, 1
      %s240 = scalar_select %p239, %s21, 1
      %p241 = scmp.lt.s32.totalorder %s22, 7
      %s242 = scalar_select %p241, %s22, 7
      %s243 = smul.addr %s240, 8
      %s244 = sadd.s32 %s242, %s243
      %s245 = smul.addr %s244, 8
      %s246 = scalar_lea.vmem %s2, %s245
      %p247 = pneg %p142
      %p248 = pneg %p139
      %p249 = scmp.lt.s32.totalorder %s21, 1
      %s250 = scalar_select %p249, %s21, 1
      %p251 = scmp.lt.s32.totalorder %s22, 7
      %s252 = scalar_select %p251, %s22, 7
      %s253 = smul.addr %s250, 8
      %s254 = sadd.s32 %s252, %s253
      %s255 = scalar_lea.vmem %s3, %s254
      %p256 = pneg %p170
      %p257 = pneg %p167
      %p258 = scmp.lt.s32.totalorder %s21, 1
      %s259 = scalar_select %p258, %s21, 1
      %p260 = scmp.lt.s32.totalorder %s22, 7
      %s261 = scalar_select %p260, %s22, 7
      %s262 = smul.addr %s259, 8
      %s263 = sadd.s32 %s261, %s262
      %s264 = scalar_lea.vmem %s4, %s263
      %s265 = sadd.s32 %s22, %s23
      %p266 = scmp.lt.s32.totalorder %s21, 1
      %s267 = scalar_select %p266, %s21, 1
      %p268 = scmp.lt.s32.totalorder %s265, 9
      %s269 = scalar_select %p268, %s265, 9
      %s270 = smul.addr %s269, 2
      %s271 = smul.addr %s267, 20
      %s272 = sadd.s32 %s270, %s271
      %s273 = smul.addr %s272, 8
      %s274 = scalar_lea.vmem %s0, %s273
      %s275 = sadd.s32 %s22, %s23
      %p276 = scmp.lt.s32.totalorder %s23, 2
      %s277 = scalar_select %p276, %s23, 2
      %s278 = smul.addr %s277, 15
      %s279 = smul.addr %s278, 8
      %s280 = scalar_lea.vmem %s1, %s279
      %p281 = scmp.lt.s32.totalorder %s21, 1
      %s282 = scalar_select %p281, %s21, 1
      %p283 = scmp.lt.s32.totalorder %s22, 7
      %s284 = scalar_select %p283, %s22, 7
      %s285 = smul.addr %s282, 8
      %s286 = sadd.s32 %s284, %s285
      %s287 = smul.addr %s286, 8
      %s288 = scalar_lea.vmem %s2, %s287
      %p289 = scmp.lt.s32.totalorder %s21, 1
      %s290 = scalar_select %p289, %s21, 1
      %p291 = scmp.lt.s32.totalorder %s22, 7
      %s292 = scalar_select %p291, %s22, 7
      %s293 = smul.addr %s290, 8
      %s294 = sadd.s32 %s292, %s293
      %s295 = scalar_lea.vmem %s3, %s294
      %p296 = scmp.lt.s32.totalorder %s21, 1
      %s297 = scalar_select %p296, %s21, 1
      %p298 = scmp.lt.s32.totalorder %s22, 7
      %s299 = scalar_select %p298, %s22, 7
      %s300 = smul.addr %s297, 8
      %s301 = sadd.s32 %s299, %s300
      %s302 = scalar_lea.vmem %s4, %s301
      %p303 = scmp.eq.s32.totalorder %s23, 0
      // Predicated region
      $region29: #{unet_layer.4} parent=27 // pred_check
        %p304 = pneg %p303
      $region30: #{unet_layer.4} parent=27 // pred_check_branch
        %306 = sbr.rel (%p304) target = $region32
      $region31: #{unet_layer.4} parent=27 // pred_region
        %vm307 = vcmask 523264
        %308 = vst.msk [vmem:[#allocation2] sm:$0xff] %vm307, 0.0
      $region32: #{unet_layer.4} parent=27 // pred_fallthru
        _
      %v309 = vld [vmem:[#allocation2] sm:$0xff]
      %v310 = vld [vmem:[%s274] sm:$0xff]
      %v311 = vld [vmem:[%s280] sm:$0xff]
      %v312 = vld [vmem:[%s280 + $0x8] sm:$0xff]
      %v313 = vld [vmem:[%s280 + $0x10] sm:$0xff]
      %v314 = vld [vmem:[%s280 + $0x18] sm:$0xff]
      %v315 = vld [vmem:[%s280 + $0x20] sm:$0xff]
      %v316 = vld [vmem:[%s274 + $0x1] sm:$0xff]
      %s317 = scalar_lea.vmem %s280, 40
      %v318 = vld [vmem:[%s317] sm:$0xff]
      %v319 = vld [vmem:[%s317 + $0x8] sm:$0xff]
      %v320 = vld [vmem:[%s317 + $0x10] sm:$0xff]
      %v321 = vld [vmem:[%s317 + $0x18] sm:$0xff]
      %v322 = vld [vmem:[%s317 + $0x20] sm:$0xff]
      %vm323 = vcmask 326656
      %v325 = vsel %vm323, %v316, 0
      %327 = vmatprep.subr.mxu0 0.0
      %328 = vmatpush1.msra.mxu0 %v318
      %329 = vmatprep.subr.mxu0 0.0
      %330 = vmatpush1.msra.mxu0 %v319
      %331 = vmatprep.subr.mxu0 0.0
      %332 = vmatpush1.msra.mxu0 %v320
      %333 = vmatprep.subr.mxu0 0.0
      %334 = vmatpush1.msra.mxu0 %v321
      %335 = vmatprep.subr.mxu0 0.0
      %336 = vmatpush1.msra.mxu0 %v322
      %337 = vmatprep.subr.mxu0 0.0
      %338 = vmatpush1.msra.mxu0 0.0
      %339 = vmatprep.subr.mxu0 0.0
      %340 = vmatpush1.msra.mxu0 0.0
      %341 = vmatprep.subr.mxu0 0.0
      %342 = vmatpush1.msra.mxu0 0.0
      %343 = vmatprep.subr.mxu0 0.0
      %344 = vmatpush1.msra.mxu0 0.0
      %345 = vmatprep.subr.mxu0 0.0
      %346 = vmatpush1.msra.mxu0 0.0
      %347 = vmatprep.subr.mxu0 0.0
      %348 = vmatpush1.msra.mxu0 0.0
      %349 = vmatprep.subr.mxu0 0.0
      %350 = vmatpush1.msra.mxu0 0.0
      %351 = vmatprep.subr.mxu0 0.0
      %352 = vmatpush1.msra.mxu0 0.0
      %353 = vmatprep.subr.mxu0 0.0
      %354 = vmatpush1.msra.mxu0 0.0
      %355 = vmatprep.subr.mxu0 0.0
      %356 = vmatpush1.msra.mxu0 0.0
      %357 = vmatprep.subr.mxu0 0.0
      %358 = vmatpush1.msra.mxu0 0.0
      %359 = vmatprep.subr.mxu0 0.0
      %360 = vmatpush1.msra.mxu0 0.0
      %361 = vmatprep.subr.mxu0 0.0
      %362 = vmatpush1.msra.mxu0 0.0
      %363 = vmatprep.subr.mxu0 0.0
      %364 = vmatpush1.msra.mxu0 0.0
      %365 = vmatprep.subr.mxu0 0.0
      %366 = vmatpush1.msra.mxu0 0.0
      %367 = vmatprep.subr.mxu0 0.0
      %368 = vmatpush1.msra.mxu0 0.0
      %369 = vmatprep.subr.mxu0 0.0
      %370 = vmatpush1.msra.mxu0 0.0
      %371 = vmatprep.subr.mxu0 0.0
      %372 = vmatpush1.msra.mxu0 0.0
      %373 = vmatprep.subr.mxu0 0.0
      %374 = vmatpush1.msra.mxu0 0.0
      %375 = vmatprep.subr.mxu0 0.0
      %376 = vmatpush1.msra.mxu0 0.0
      %377 = vmatprep.subr.mxu0 0.0
      %378 = vmatpush1.msra.mxu0 0.0
      %379 = vmatprep.subr.mxu0 0.0
      %380 = vmatpush1.msra.mxu0 0.0
      %381 = vmatprep.subr.mxu0 0.0
      %382 = vmatpush1.msra.mxu0 0.0
      %383 = vmatprep.subr.mxu0 0.0
      %384 = vmatpush1.msra.mxu0 0.0
      %385 = vmatprep.subr.mxu0 0.0
      %386 = vmatpush1.msra.mxu0 0.0
      %387 = vmatprep.subr.mxu0 0.0
      %388 = vmatpush1.msra.mxu0 0.0
      %389 = vmatprep.subr.mxu0 0.0
      %390 = vmatpush1.msra.mxu0 0.0
      %391 = vmatprep.mubr.f32.mxu0 0.0
      %392 = vmatmul.mubr.f32.gmra.mrb[0].mxu0 %v325
      %v393 = vpop.f32.mrb[0].mxu0
      %v394 = vadd.f32 0.0, %v393
      %v395 = vpop.f32.mrb[0].mxu0
      %396 = vdwg.mxu0
      %v398 = vsel %vm323, %v310, 0
      %400 = vmatprep.subr.mxu0 0.0
      %401 = vmatpush1.msra.mxu0 %v311
      %402 = vmatprep.subr.mxu0 0.0
      %403 = vmatpush1.msra.mxu0 %v312
      %404 = vmatprep.subr.mxu0 0.0
      %405 = vmatpush1.msra.mxu0 %v313
      %406 = vmatprep.subr.mxu0 0.0
      %407 = vmatpush1.msra.mxu0 %v314
      %408 = vmatprep.subr.mxu0 0.0
      %409 = vmatpush1.msra.mxu0 %v315
      %410 = vmatprep.subr.mxu0 0.0
      %411 = vmatpush1.msra.mxu0 0.0
      %412 = vmatprep.subr.mxu0 0.0
      %413 = vmatpush1.msra.mxu0 0.0
      %414 = vmatprep.subr.mxu0 0.0
      %415 = vmatpush1.msra.mxu0 0.0
      %416 = vmatprep.subr.mxu0 0.0
      %417 = vmatpush1.msra.mxu0 0.0
      %418 = vmatprep.subr.mxu0 0.0
      %419 = vmatpush1.msra.mxu0 0.0
      %420 = vmatprep.subr.mxu0 0.0
      %421 = vmatpush1.msra.mxu0 0.0
      %422 = vmatprep.subr.mxu0 0.0
      %423 = vmatpush1.msra.mxu0 0.0
      %424 = vmatprep.subr.mxu0 0.0
      %425 = vmatpush1.msra.mxu0 0.0
      %426 = vmatprep.subr.mxu0 0.0
      %427 = vmatpush1.msra.mxu0 0.0
      %428 = vmatprep.subr.mxu0 0.0
      %429 = vmatpush1.msra.mxu0 0.0
      %430 = vmatprep.subr.mxu0 0.0
      %431 = vmatpush1.msra.mxu0 0.0
      %432 = vmatprep.subr.mxu0 0.0
      %433 = vmatpush1.msra.mxu0 0.0
      %434 = vmatprep.subr.mxu0 0.0
      %435 = vmatpush1.msra.mxu0 0.0
      %436 = vmatprep.subr.mxu0 0.0
      %437 = vmatpush1.msra.mxu0 0.0
      %438 = vmatprep.subr.mxu0 0.0
      %439 = vmatpush1.msra.mxu0 0.0
      %440 = vmatprep.subr.mxu0 0.0
      %441 = vmatpush1.msra.mxu0 0.0
      %442 = vmatprep.subr.mxu0 0.0
      %443 = vmatpush1.msra.mxu0 0.0
      %444 = vmatprep.subr.mxu0 0.0
      %445 = vmatpush1.msra.mxu0 0.0
      %446 = vmatprep.subr.mxu0 0.0
      %447 = vmatpush1.msra.mxu0 0.0
      %448 = vmatprep.subr.mxu0 0.0
      %449 = vmatpush1.msra.mxu0 0.0
      %450 = vmatprep.subr.mxu0 0.0
      %451 = vmatpush1.msra.mxu0 0.0
      %452 = vmatprep.subr.mxu0 0.0
      %453 = vmatpush1.msra.mxu0 0.0
      %454 = vmatprep.subr.mxu0 0.0
      %455 = vmatpush1.msra.mxu0 0.0
      %456 = vmatprep.subr.mxu0 0.0
      %457 = vmatpush1.msra.mxu0 0.0
      %458 = vmatprep.subr.mxu0 0.0
      %459 = vmatpush1.msra.mxu0 0.0
      %460 = vmatprep.subr.mxu0 0.0
      %461 = vmatpush1.msra.mxu0 0.0
      %462 = vmatprep.subr.mxu0 0.0
      %463 = vmatpush1.msra.mxu0 0.0
      %464 = vmatprep.mubr.f32.mxu0 0.0
      %465 = vmatmul.mubr.f32.gmra.mrb[0].mxu0 %v398
      %v466 = vpop.f32.mrb[0].mxu0
      %v467 = vadd.f32 %v394, %v466
      %v468 = vpop.f32.mrb[0].mxu0
      %469 = vdwg.mxu0
      %v470 = vld [vmem:[%s274 + $0x2] sm:$0xff]
      %s471 = scalar_lea.vmem %s280, 80
      %v472 = vld [vmem:[%s471] sm:$0xff]
      %v473 = vld [vmem:[%s471 + $0x8] sm:$0xff]
      %v474 = vld [vmem:[%s471 + $0x10] sm:$0xff]
      %v475 = vld [vmem:[%s471 + $0x18] sm:$0xff]
      %v476 = vld [vmem:[%s471 + $0x20] sm:$0xff]
      %v478 = vsel %vm323, %v470, 0
      %480 = vmatprep.subr.mxu0 0.0
      %481 = vmatpush1.msra.mxu0 %v472
      %482 = vmatprep.subr.mxu0 0.0
      %483 = vmatpush1.msra.mxu0 %v473
      %484 = vmatprep.subr.mxu0 0.0
      %485 = vmatpush1.msra.mxu0 %v474
      %486 = vmatprep.subr.mxu0 0.0
      %487 = vmatpush1.msra.mxu0 %v475
      %488 = vmatprep.subr.mxu0 0.0
      %489 = vmatpush1.msra.mxu0 %v476
      %490 = vmatprep.subr.mxu0 0.0
      %491 = vmatpush1.msra.mxu0 0.0
      %492 = vmatprep.subr.mxu0 0.0
      %493 = vmatpush1.msra.mxu0 0.0
      %494 = vmatprep.subr.mxu0 0.0
      %495 = vmatpush1.msra.mxu0 0.0
      %496 = vmatprep.subr.mxu0 0.0
      %497 = vmatpush1.msra.mxu0 0.0
      %498 = vmatprep.subr.mxu0 0.0
      %499 = vmatpush1.msra.mxu0 0.0
      %500 = vmatprep.subr.mxu0 0.0
      %501 = vmatpush1.msra.mxu0 0.0
      %502 = vmatprep.subr.mxu0 0.0
      %503 = vmatpush1.msra.mxu0 0.0
      %504 = vmatprep.subr.mxu0 0.0
      %505 = vmatpush1.msra.mxu0 0.0
      %506 = vmatprep.subr.mxu0 0.0
      %507 = vmatpush1.msra.mxu0 0.0
      %508 = vmatprep.subr.mxu0 0.0
      %509 = vmatpush1.msra.mxu0 0.0
      %510 = vmatprep.subr.mxu0 0.0
      %511 = vmatpush1.msra.mxu0 0.0
      %512 = vmatprep.subr.mxu0 0.0
      %513 = vmatpush1.msra.mxu0 0.0
      %514 = vmatprep.subr.mxu0 0.0
      %515 = vmatpush1.msra.mxu0 0.0
      %516 = vmatprep.subr.mxu0 0.0
      %517 = vmatpush1.msra.mxu0 0.0
      %518 = vmatprep.subr.mxu0 0.0
      %519 = vmatpush1.msra.mxu0 0.0
      %520 = vmatprep.subr.mxu0 0.0
      %521 = vmatpush1.msra.mxu0 0.0
      %522 = vmatprep.subr.mxu0 0.0
      %523 = vmatpush1.msra.mxu0 0.0
      %524 = vmatprep.subr.mxu0 0.0
      %525 = vmatpush1.msra.mxu0 0.0
      %526 = vmatprep.subr.mxu0 0.0
      %527 = vmatpush1.msra.mxu0 0.0
      %528 = vmatprep.subr.mxu0 0.0
      %529 = vmatpush1.msra.mxu0 0.0
      %530 = vmatprep.subr.mxu0 0.0
      %531 = vmatpush1.msra.mxu0 0.0
      %532 = vmatprep.subr.mxu0 0.0
      %533 = vmatpush1.msra.mxu0 0.0
      %534 = vmatprep.subr.mxu0 0.0
      %535 = vmatpush1.msra.mxu0 0.0
      %536 = vmatprep.subr.mxu0 0.0
      %537 = vmatpush1.msra.mxu0 0.0
      %538 = vmatprep.subr.mxu0 0.0
      %539 = vmatpush1.msra.mxu0 0.0
      %540 = vmatprep.subr.mxu0 0.0
      %541 = vmatpush1.msra.mxu0 0.0
      %542 = vmatprep.subr.mxu0 0.0
      %543 = vmatpush1.msra.mxu0 0.0
      %544 = vmatprep.mubr.f32.mxu0 0.0
      %545 = vmatmul.mubr.f32.gmra.mrb[0].mxu0 %v478
      %v546 = vpop.f32.mrb[0].mxu0
      %v547 = vadd.f32 0.0, %v546
      %v548 = vpop.f32.mrb[0].mxu0
      %549 = vdwg.mxu0
      %v550 = vadd.f32 %v467, %v547
      %v551 = vadd.f32 %v309, %v550
      %vm552 = vcmask 523264
      %553 = vst.msk [vmem:[#allocation2] sm:$0xff] %vm552, %v551
      %p554 = scmp.eq.s32.totalorder %s23, 2
      // Predicated region
      $region33: #{unet_layer.4} parent=27 // pred_check
        %p555 = pneg %p554
      $region34: #{unet_layer.4} parent=27 // pred_check_branch
        %557 = sbr.rel (%p555) target = $region36
      $region35: #{unet_layer.4} parent=27 // pred_region
        %v558 = vld [vmem:[#allocation2] sm:$0xff]
        %559 = vst.msk [vmem:[%s288] sm:$0xff] %vm552, %v558
        %v560 = vsel %vm552, %v558, 0.0
        %v561 = vrot.slane %v560, 4
        %v562 = vadd.f32 %v560, %v561
        %v563 = vrot.slane %v562, 2
        %v564 = vadd.f32 %v562, %v563
        %v565 = vrot.slane %v564, 1
        %v566 = vadd.f32 %v564, %v565
        %vm567 = vcmask 516096
        %568 = vst.msk [vmem:[%s295] sm:$0x1] %vm567, %v566
        %v569 = vmul.f32 %v558, %v558
        %v570 = vsel %vm552, %v569, 0.0
        %v571 = vrot.slane %v570, 4
        %v572 = vadd.f32 %v570, %v571
        %v573 = vrot.slane %v572, 2
        %v574 = vadd.f32 %v572, %v573
        %v575 = vrot.slane %v574, 1
        %v576 = vadd.f32 %v574, %v575
        %577 = vst.msk [vmem:[%s302] sm:$0x1] %vm567, %v576
      $region36: #{unet_layer.4} parent=27 // pred_fallthru
        _
      %p578 = scmp.lt.s32.totalorder %s21, 1
      %s579 = scalar_select %p578, %s21, 1
      %p580 = scmp.lt.s32.totalorder %s22, 7
      %s581 = scalar_select %p580, %s22, 7
      %s582 = smul.addr %s579, 8
      %s583 = sadd.s32 %s581, %s582
      %s584 = smul.addr %s583, 8
      %s585 = scalar_lea.vmem %s2, %s584
      %p586 = scmp.lt.s32.totalorder %s21, 1
      %s587 = scalar_select %p586, %s21, 1
      %p588 = scmp.lt.s32.totalorder %s22, 7
      %s589 = scalar_select %p588, %s22, 7
      %s590 = smul.addr %s587, 8
      %s591 = sadd.s32 %s589, %s590
      %s592 = scalar_lea.vmem %s3, %s591
      %p593 = scmp.lt.s32.totalorder %s21, 1
      %s594 = scalar_select %p593, %s21, 1
      %p595 = scmp.lt.s32.totalorder %s22, 7
      %s596 = scalar_select %p595, %s22, 7
      %s597 = smul.addr %s594, 8
      %s598 = sadd.s32 %s596, %s597
      %s599 = scalar_lea.vmem %s4, %s598
      // Predicated region
      $region37: #{unet_layer.4} parent=27 // pred_check
        %p600 = pneg %p111
      $region38: #{unet_layer.4} parent=27 // pred_check_branch
        %602 = sbr.rel (%p600) target = $region40
      $region39: #{unet_layer.4} parent=27 // pred_region
        _
      $region40: #{unet_layer.4} parent=27 // pred_fallthru
        _
      // Predicated region
      $region41: #{unet_layer.4} parent=27 // pred_check
        %p603 = pneg %p139
      $region42: #{unet_layer.4} parent=27 // pred_check_branch
        %605 = sbr.rel (%p603) target = $region44
      $region43: #{unet_layer.4} parent=27 // pred_region
        _
      $region44: #{unet_layer.4} parent=27 // pred_fallthru
        _
      // Predicated region
      $region45: #{unet_layer.4} parent=27 // pred_check
        %p606 = pneg %p167
      $region46: #{unet_layer.4} parent=27 // pred_check_branch
        %608 = sbr.rel (%p606) target = $region48
      $region47: #{unet_layer.4} parent=27 // pred_region
        _
      $region48: #{unet_layer.4} parent=27 // pred_fallthru
        _
    $region28: #{unet_layer.4} parent=5 // pred_fallthru
      _
    %p609 = scmp.le.s32.totalorder 2, %s11
    // Predicated region
    $region49: #{unet_layer.4} parent=5 // pred_check
      %p610 = pneg %p609
    $region50: #{unet_layer.4} parent=5 // pred_check_branch
      %612 = sbr.rel (%p610) target = $region52
    $region51: #{unet_layer.4} parent=5 // pred_region
      %s613 = ssub.s32 %s11, 2
      // Predicated region
      $region53: #{unet_layer.4} parent=51 // pred_check
        %p614 = pneg %p117
      $region54: #{unet_layer.4} parent=51 // pred_check_branch
        %616 = sbr.rel (%p614) target = $region56
      $region55: #{unet_layer.4} parent=51 // pred_region
        %p617 = scmp.lt.s32.totalorder %s24, 1
        %s618 = scalar_select %p617, %s24, 1
        %p619 = scmp.lt.s32.totalorder %s25, 7
        %s620 = scalar_select %p619, %s25, 7
        %s621 = smul.addr %s618, 8
        %s622 = sadd.s32 %s620, %s621
        %s623 = smul.addr %s622, 8
        %s624 = scalar_lea.vmem %s2, %s623
      $region56: #{unet_layer.4} parent=51 // pred_fallthru
        _
      // Predicated region
      $region57: #{unet_layer.4} parent=51 // pred_check
        %p625 = pneg %p145
      $region58: #{unet_layer.4} parent=51 // pred_check_branch
        %627 = sbr.rel (%p625) target = $region60
      $region59: #{unet_layer.4} parent=51 // pred_region
        %p628 = scmp.lt.s32.totalorder %s24, 1
        %s629 = scalar_select %p628, %s24, 1
        %p630 = scmp.lt.s32.totalorder %s25, 7
        %s631 = scalar_select %p630, %s25, 7
        %s632 = smul.addr %s629, 8
        %s633 = sadd.s32 %s631, %s632
        %s634 = scalar_lea.vmem %s3, %s633
      $region60: #{unet_layer.4} parent=51 // pred_fallthru
        _
      // Predicated region
      $region61: #{unet_layer.4} parent=51 // pred_check
        %p635 = pneg %p173
      $region62: #{unet_layer.4} parent=51 // pred_check_branch
        %637 = sbr.rel (%p635) target = $region64
      $region63: #{unet_layer.4} parent=51 // pred_region
        %p638 = scmp.lt.s32.totalorder %s24, 1
        %s639 = scalar_select %p638, %s24, 1
        %p640 = scmp.lt.s32.totalorder %s25, 7
        %s641 = scalar_select %p640, %s25, 7
        %s642 = smul.addr %s639, 8
        %s643 = sadd.s32 %s641, %s642
        %s644 = scalar_lea.vmem %s4, %s643
      $region64: #{unet_layer.4} parent=51 // pred_fallthru
        _
    $region52: #{unet_layer.4} parent=5 // pred_fallthru
      _
  $region6: #{unet_layer.4} parent=0 // loop_footer
    %s15 = sadd.s32 1, %s11
  $region7: #{unet_layer.4} parent=0 // loop_footer_branch
    %10 = sbr.rel target = $region3
  $region8: #{unet_layer.4} parent=0 // loop_exit
    _

// kernel: tile.28
$region0: #{tile.28}
  #allocation0 [shape = 's32[1]{0}', space=sflag, size = 0x4, scoped, tag = 'scoped memory for tile.28']
  %s0 = inlined_call_operand.vmem [shape: f32[8], index: 0, kind: input, shape index: {}]
  %s1 = inlined_call_operand.vmem [shape: f32[128,8], index: 1, kind: output, shape index: {}]
  // Predicated region
  $region2: #{tile.28} parent=0 // pred_check
    _
  $region3: #{tile.28} parent=0 // pred_check_branch
    %3 = sbr.rel (0) target = $region5
  $region4: #{tile.28} parent=0 // pred_region
    _
  $region5: #{tile.28} parent=0 // pred_fallthru
    _
  %v4 = vld [vmem:[%s0] ss:$0 sm:$0xff]
  %5 = vst [vmem:[%s1] sm:$0xff] %v4
  %s6 = scalar_lea.vmem %s1, 8
  %7 = vst [vmem:[%s6] sm:$0xff] %v4
  %s8 = scalar_lea.vmem %s1, 16
  %9 = vst [vmem:[%s8] sm:$0xff] %v4
  %s10 = scalar_lea.vmem %s1, 24
  %11 = vst [vmem:[%s10] sm:$0xff] %v4
  %s12 = scalar_lea.vmem %s1, 32
  %13 = vst [vmem:[%s12] sm:$0xff] %v4
  %s14 = scalar_lea.vmem %s1, 40
  %15 = vst [vmem:[%s14] sm:$0xff] %v4
  %s16 = scalar_lea.vmem %s1, 48
  %17 = vst [vmem:[%s16] sm:$0xff] %v4
  %s18 = scalar_lea.vmem %s1, 56
  %19 = vst [vmem:[%s18] sm:$0xff] %v4
  %s20 = scalar_lea.vmem %s1, 64
  %21 = vst [vmem:[%s20] sm:$0xff] %v4
  %s22 = scalar_lea.vmem %s1, 72
  %23 = vst [vmem:[%s22] sm:$0xff] %v4
  %s24 = scalar_lea.vmem %s1, 80
  %25 = vst [vmem:[%s24] sm:$0xff] %v4
  %s26 = scalar_lea.vmem %s1, 88
  %27 = vst [vmem:[%s26] sm:$0xff] %v4
  %s28 = scalar_lea.vmem %s1, 96
  %29 = vst [vmem:[%s28] sm:$0xff] %v4
  %s30 = scalar_lea.vmem %s1, 104
  %31 = vst [vmem:[%s30] sm:$0xff] %v4
  %s32 = scalar_lea.vmem %s1, 112
  %33 = vst [vmem:[%s32] sm:$0xff] %v4
  %s34 = scalar_lea.vmem %s1, 120
  %35 = vst [vmem:[%s34] sm:$0xff] %v4

// kernel: tile.29
$region0: #{tile.29}
  %s0 = inlined_call_operand.vmem [shape: f32[128,8], index: 0, kind: input, shape index: {}]
  %s1 = inlined_call_operand.vmem [shape: f32[1,1024], index: 1, kind: output, shape index: {}]
  $region1: #{tile.29} parent=0
    #allocation0 [shape = 'u8[32768]{0}', space=vmem, size = 0x8000, scoped, tag = 'scoped mem for output reshape']
    %s2 = smov 3
    %v3 = vld [vmem:[%s0] ss:$16 sm:%s2]
    %s4 = smov 12
    %v5 = vld [vmem:[%s0] ss:$16 sm:%s4]
    %vm6 = vcmask 1043458
    %v7 = vsel %vm6, %v5, %v3
    %s8 = smov 48
    %v9 = vld [vmem:[%s0] ss:$16 sm:%s8]
    %vm10 = vcmask 1045508
    %v11 = vsel %vm10, %v9, %v7
    %s12 = smov 192
    %v13 = vld [vmem:[%s0] ss:$16 sm:%s12]
    %vm14 = vcmask 1047558
    %v15 = vsel %vm14, %v13, %v11
    %vm16 = vcmask 64512
    %17 = vst.msk [vmem:[#allocation0] ss:$8 sm:$0xf] %vm16, %v15
    %18 = vst.msk [vmem:[#allocation0] ss:$8 sm:$0xf0] %vm16, %v15
    %s19 = scalar_lea.vmem %s0, 15
    %s20 = smov 3
    %v21 = vld [vmem:[%s19] ss:$16 sm:%s20]
    %s22 = scalar_lea.vmem %s0, 15
    %s23 = smov 12
    %v24 = vld [vmem:[%s22] ss:$16 sm:%s23]
    %vm25 = vcmask 1043458
    %v26 = vsel %vm25, %v24, %v21
    %s27 = scalar_lea.vmem %s0, 15
    %s28 = smov 48
    %v29 = vld [vmem:[%s27] ss:$16 sm:%s28]
    %vm30 = vcmask 1045508
    %v31 = vsel %vm30, %v29, %v26
    %s32 = scalar_lea.vmem %s0, 15
    %s33 = smov 192
    %v34 = vld [vmem:[%s32] ss:$16 sm:%s33]
    %vm35 = vcmask 1047558
    %v36 = vsel %vm35, %v34, %v31
    %37 = vrot.lane.b32.xlu0 %v36, 120
    %v38 = vpop.permute.xlu0 %37
    %vm39 = vcmask 1048512
    %40 = vst.msk [vmem:[#allocation0] ss:$8 sm:$0xf] %vm39, %v38
    %41 = vst.msk [vmem:[#allocation0] ss:$8 sm:$0xf0] %vm39, %v38
    %s42 = scalar_lea.vmem %s0, 14
    %s43 = smov 3
    %v44 = vld [vmem:[%s42] ss:$16 sm:%s43]
    %s45 = scalar_lea.vmem %s0, 14
    %s46 = smov 12
    %v47 = vld [vmem:[%s45] ss:$16 sm:%s46]
    %vm48 = vcmask 1043458
    %v49 = vsel %vm48, %v47, %v44
    %s50 = scalar_lea.vmem %s0, 14
    %s51 = smov 48
    %v52 = vld [vmem:[%s50] ss:$16 sm:%s51]
    %vm53 = vcmask 1045508
    %v54 = vsel %vm53, %v52, %v49
    %s55 = scalar_lea.vmem %s0, 14
    %s56 = smov 192
    %v57 = vld [vmem:[%s55] ss:$16 sm:%s56]
    %vm58 = vcmask 1047558
    %v59 = vsel %vm58, %v57, %v54
    %60 = vrot.lane.b32.xlu0 %v59, 112
    %v61 = vpop.permute.xlu0 %60
    %vm62 = vcmask 982912
    %63 = vst.msk [vmem:[#allocation0] ss:$8 sm:$0xf] %vm62, %v61
    %64 = vst.msk [vmem:[#allocation0] ss:$8 sm:$0xf0] %vm62, %v61
    %s65 = scalar_lea.vmem %s0, 13
    %s66 = smov 3
    %v67 = vld [vmem:[%s65] ss:$16 sm:%s66]
    %s68 = scalar_lea.vmem %s0, 13
    %s69 = smov 12
    %v70 = vld [vmem:[%s68] ss:$16 sm:%s69]
    %vm71 = vcmask 1043458
    %v72 = vsel %vm71, %v70, %v67
    %s73 = scalar_lea.vmem %s0, 13
    %s74 = smov 48
    %v75 = vld [vmem:[%s73] ss:$16 sm:%s74]
    %vm76 = vcmask 1045508
    %v77 = vsel %vm76, %v75, %v72
    %s78 = scalar_lea.vmem %s0, 13
    %s79 = smov 192
    %v80 = vld [vmem:[%s78] ss:$16 sm:%s79]
    %vm81 = vcmask 1047558
    %v82 = vsel %vm81, %v80, %v77
    %83 = vrot.lane.b32.xlu0 %v82, 104
    %v84 = vpop.permute.xlu0 %83
    %vm85 = vcmask 917312
    %86 = vst.msk [vmem:[#allocation0] ss:$8 sm:$0xf] %vm85, %v84
    %87 = vst.msk [vmem:[#allocation0] ss:$8 sm:$0xf0] %vm85, %v84
    %s88 = scalar_lea.vmem %s0, 12
    %s89 = smov 3
    %v90 = vld [vmem:[%s88] ss:$16 sm:%s89]
    %s91 = scalar_lea.vmem %s0, 12
    %s92 = smov 12
    %v93 = vld [vmem:[%s91] ss:$16 sm:%s92]
    %vm94 = vcmask 1043458
    %v95 = vsel %vm94, %v93, %v90
    %s96 = scalar_lea.vmem %s0, 12
    %s97 = smov 48
    %v98 = vld [vmem:[%s96] ss:$16 sm:%s97]
    %vm99 = vcmask 1045508
    %v100 = vsel %vm99, %v98, %v95
    %s101 = scalar_lea.vmem %s0, 12
    %s102 = smov 192
    %v103 = vld [vmem:[%s101] ss:$16 sm:%s102]
    %vm104 = vcmask 1047558
    %v105 = vsel %vm104, %v103, %v100
    %106 = vrot.lane.b32.xlu0 %v105, 96
    %v107 = vpop.permute.xlu0 %106
    %vm108 = vcmask 851712
    %109 = vst.msk [vmem:[#allocation0] ss:$8 sm:$0xf] %vm108, %v107
    %110 = vst.msk [vmem:[#allocation0] ss:$8 sm:$0xf0] %vm108, %v107
    %s111 = scalar_lea.vmem %s0, 11
    %s112 = smov 3
    %v113 = vld [vmem:[%s111] ss:$16 sm:%s112]
    %s114 = scalar_lea.vmem %s0, 11
    %s115 = smov 12
    %v116 = vld [vmem:[%s114] ss:$16 sm:%s115]
    %vm117 = vcmask 1043458
    %v118 = vsel %vm117, %v116, %v113
    %s119 = scalar_lea.vmem %s0, 11
    %s120 = smov 48
    %v121 = vld [vmem:[%s119] ss:$16 sm:%s120]
    %vm122 = vcmask 1045508
    %v123 = vsel %vm122, %v121, %v118
    %s124 = scalar_lea.vmem %s0, 11
    %s125 = smov 192
    %v126 = vld [vmem:[%s124] ss:$16 sm:%s125]
    %vm127 = vcmask 1047558
    %v128 = vsel %vm127, %v126, %v123
    %129 = vrot.lane.b32.xlu0 %v128, 88
    %v130 = vpop.permute.xlu0 %129
    %vm131 = vcmask 786112
    %132 = vst.msk [vmem:[#allocation0] ss:$8 sm:$0xf] %vm131, %v130
    %133 = vst.msk [vmem:[#allocation0] ss:$8 sm:$0xf0] %vm131, %v130
    %s134 = scalar_lea.vmem %s0, 10
    %s135 = smov 3
    %v136 = vld [vmem:[%s134] ss:$16 sm:%s135]
    %s137 = scalar_lea.vmem %s0, 10
    %s138 = smov 12
    %v139 = vld [vmem:[%s137] ss:$16 sm:%s138]
    %vm140 = vcmask 1043458
    %v141 = vsel %vm140, %v139, %v136
    %s142 = scalar_lea.vmem %s0, 10
    %s143 = smov 48
    %v144 = vld [vmem:[%s142] ss:$16 sm:%s143]
    %vm145 = vcmask 1045508
    %v146 = vsel %vm145, %v144, %v141
    %s147 = scalar_lea.vmem %s0, 10
    %s148 = smov 192
    %v149 = vld [vmem:[%s147] ss:$16 sm:%s148]
    %vm150 = vcmask 1047558
    %v151 = vsel %vm150, %v149, %v146
    %152 = vrot.lane.b32.xlu0 %v151, 80
    %v153 = vpop.permute.xlu0 %152
    %vm154 = vcmask 720512
    %155 = vst.msk [vmem:[#allocation0] ss:$8 sm:$0xf] %vm154, %v153
    %156 = vst.msk [vmem:[#allocation0] ss:$8 sm:$0xf0] %vm154, %v153
    %s157 = scalar_lea.vmem %s0, 9
    %s158 = smov 3
    %v159 = vld [vmem:[%s157] ss:$16 sm:%s158]
    %s160 = scalar_lea.vmem %s0, 9
    %s161 = smov 12
    %v162 = vld [vmem:[%s160] ss:$16 sm:%s161]
    %vm163 = vcmask 1043458
    %v164 = vsel %vm163, %v162, %v159
    %s165 = scalar_lea.vmem %s0, 9
    %s166 = smov 48
    %v167 = vld [vmem:[%s165] ss:$16 sm:%s166]
    %vm168 = vcmask 1045508
    %v169 = vsel %vm168, %v167, %v164
    %s170 = scalar_lea.vmem %s0, 9
    %s171 = smov 192
    %v172 = vld [vmem:[%s170] ss:$16 sm:%s171]
    %vm173 = vcmask 1047558
    %v174 = vsel %vm173, %v172, %v169
    %175 = vrot.lane.b32.xlu0 %v174, 72
    %v176 = vpop.permute.xlu0 %175
    %vm177 = vcmask 654912
    %178 = vst.msk [vmem:[#allocation0] ss:$8 sm:$0xf] %vm177, %v176
    %179 = vst.msk [vmem:[#allocation0] ss:$8 sm:$0xf0] %vm177, %v176
    %s180 = scalar_lea.vmem %s0, 8
    %s181 = smov 3
    %v182 = vld [vmem:[%s180] ss:$16 sm:%s181]
    %s183 = scalar_lea.vmem %s0, 8
    %s184 = smov 12
    %v185 = vld [vmem:[%s183] ss:$16 sm:%s184]
    %vm186 = vcmask 1043458
    %v187 = vsel %vm186, %v185, %v182
    %s188 = scalar_lea.vmem %s0, 8
    %s189 = smov 48
    %v190 = vld [vmem:[%s188] ss:$16 sm:%s189]
    %vm191 = vcmask 1045508
    %v192 = vsel %vm191, %v190, %v187
    %s193 = scalar_lea.vmem %s0, 8
    %s194 = smov 192
    %v195 = vld [vmem:[%s193] ss:$16 sm:%s194]
    %vm196 = vcmask 1047558
    %v197 = vsel %vm196, %v195, %v192
    %198 = vrot.lane.b32.xlu0 %v197, 64
    %v199 = vpop.permute.xlu0 %198
    %vm200 = vcmask 589312
    %201 = vst.msk [vmem:[#allocation0] ss:$8 sm:$0xf] %vm200, %v199
    %202 = vst.msk [vmem:[#allocation0] ss:$8 sm:$0xf0] %vm200, %v199
    %s203 = scalar_lea.vmem %s0, 7
    %s204 = smov 3
    %v205 = vld [vmem:[%s203] ss:$16 sm:%s204]
    %s206 = scalar_lea.vmem %s0, 7
    %s207 = smov 12
    %v208 = vld [vmem:[%s206] ss:$16 sm:%s207]
    %vm209 = vcmask 1043458
    %v210 = vsel %vm209, %v208, %v205
    %s211 = scalar_lea.vmem %s0, 7
    %s212 = smov 48
    %v213 = vld [vmem:[%s211] ss:$16 sm:%s212]
    %vm214 = vcmask 1045508
    %v215 = vsel %vm214, %v213, %v210
    %s216 = scalar_lea.vmem %s0, 7
    %s217 = smov 192
    %v218 = vld [vmem:[%s216] ss:$16 sm:%s217]
    %vm219 = vcmask 1047558
    %v220 = vsel %vm219, %v218, %v215
    %221 = vrot.lane.b32.xlu0 %v220, 56
    %v222 = vpop.permute.xlu0 %221
    %vm223 = vcmask 523712
    %224 = vst.msk [vmem:[#allocation0] ss:$8 sm:$0xf] %vm223, %v222
    %225 = vst.msk [vmem:[#allocation0] ss:$8 sm:$0xf0] %vm223, %v222
    %s226 = scalar_lea.vmem %s0, 6
    %s227 = smov 3
    %v228 = vld [vmem:[%s226] ss:$16 sm:%s227]
    %s229 = scalar_lea.vmem %s0, 6
    %s230 = smov 12
    %v231 = vld [vmem:[%s229] ss:$16 sm:%s230]
    %vm232 = vcmask 1043458
    %v233 = vsel %vm232, %v231, %v228
    %s234 = scalar_lea.vmem %s0, 6
    %s235 = smov 48
    %v236 = vld [vmem:[%s234] ss:$16 sm:%s235]
    %vm237 = vcmask 1045508
    %v238 = vsel %vm237, %v236, %v233
    %s239 = scalar_lea.vmem %s0, 6
    %s240 = smov 192
    %v241 = vld [vmem:[%s239] ss:$16 sm:%s240]
    %vm242 = vcmask 1047558
    %v243 = vsel %vm242, %v241, %v238
    %244 = vrot.lane.b32.xlu0 %v243, 48
    %v245 = vpop.permute.xlu0 %244
    %vm246 = vcmask 458112
    %247 = vst.msk [vmem:[#allocation0] ss:$8 sm:$0xf] %vm246, %v245
    %248 = vst.msk [vmem:[#allocation0] ss:$8 sm:$0xf0] %vm246, %v245
    %s249 = scalar_lea.vmem %s0, 5
    %s250 = smov 3
    %v251 = vld [vmem:[%s249] ss:$16 sm:%s250]
    %s252 = scalar_lea.vmem %s0, 5
    %s253 = smov 12
    %v254 = vld [vmem:[%s252] ss:$16 sm:%s253]
    %vm255 = vcmask 1043458
    %v256 = vsel %vm255, %v254, %v251
    %s257 = scalar_lea.vmem %s0, 5
    %s258 = smov 48
    %v259 = vld [vmem:[%s257] ss:$16 sm:%s258]
    %vm260 = vcmask 1045508
    %v261 = vsel %vm260, %v259, %v256
    %s262 = scalar_lea.vmem %s0, 5
    %s263 = smov 192
    %v264 = vld [vmem:[%s262] ss:$16 sm:%s263]
    %vm265 = vcmask 1047558
    %v266 = vsel %vm265, %v264, %v261
    %267 = vrot.lane.b32.xlu0 %v266, 40
    %v268 = vpop.permute.xlu0 %267
    %vm269 = vcmask 392512
    %270 = vst.msk [vmem:[#allocation0] ss:$8 sm:$0xf] %vm269, %v268
    %271 = vst.msk [vmem:[#allocation0] ss:$8 sm:$0xf0] %vm269, %v268
    %s272 = scalar_lea.vmem %s0, 4
    %s273 = smov 3
    %v274 = vld [vmem:[%s272] ss:$16 sm:%s273]
    %s275 = scalar_lea.vmem %s0, 4
    %s276 = smov 12
    %v277 = vld [vmem:[%s275] ss:$16 sm:%s276]
    %vm278 = vcmask 1043458
    %v279 = vsel %vm278, %v277, %v274
    %s280 = scalar_lea.vmem %s0, 4
    %s281 = smov 48
    %v282 = vld [vmem:[%s280] ss:$16 sm:%s281]
    %vm283 = vcmask 1045508
    %v284 = vsel %vm283, %v282, %v279
    %s285 = scalar_lea.vmem %s0, 4
    %s286 = smov 192
    %v287 = vld [vmem:[%s285] ss:$16 sm:%s286]
    %vm288 = vcmask 1047558
    %v289 = vsel %vm288, %v287, %v284
    %290 = vrot.lane.b32.xlu0 %v289, 32
    %v291 = vpop.permute.xlu0 %290
    %vm292 = vcmask 326912
    %293 = vst.msk [vmem:[#allocation0] ss:$8 sm:$0xf] %vm292, %v291
    %294 = vst.msk [vmem:[#allocation0] ss:$8 sm:$0xf0] %vm292, %v291
    %s295 = scalar_lea.vmem %s0, 3
    %s296 = smov 3
    %v297 = vld [vmem:[%s295] ss:$16 sm:%s296]
    %s298 = scalar_lea.vmem %s0, 3
    %s299 = smov 12
    %v300 = vld [vmem:[%s298] ss:$16 sm:%s299]
    %vm301 = vcmask 1043458
    %v302 = vsel %vm301, %v300, %v297
    %s303 = scalar_lea.vmem %s0, 3
    %s304 = smov 48
    %v305 = vld [vmem:[%s303] ss:$16 sm:%s304]
    %vm306 = vcmask 1045508
    %v307 = vsel %vm306, %v305, %v302
    %s308 = scalar_lea.vmem %s0, 3
    %s309 = smov 192
    %v310 = vld [vmem:[%s308] ss:$16 sm:%s309]
    %vm311 = vcmask 1047558
    %v312 = vsel %vm311, %v310, %v307
    %313 = vrot.lane.b32.xlu0 %v312, 24
    %v314 = vpop.permute.xlu0 %313
    %vm315 = vcmask 261312
    %316 = vst.msk [vmem:[#allocation0] ss:$8 sm:$0xf] %vm315, %v314
    %317 = vst.msk [vmem:[#allocation0] ss:$8 sm:$0xf0] %vm315, %v314
    %s318 = scalar_lea.vmem %s0, 2
    %s319 = smov 3
    %v320 = vld [vmem:[%s318] ss:$16 sm:%s319]
    %s321 = scalar_lea.vmem %s0, 2
    %s322 = smov 12
    %v323 = vld [vmem:[%s321] ss:$16 sm:%s322]
    %vm324 = vcmask 1043458
    %v325 = vsel %vm324, %v323, %v320
    %s326 = scalar_lea.vmem %s0, 2
    %s327 = smov 48
    %v328 = vld [vmem:[%s326] ss:$16 sm:%s327]
    %vm329 = vcmask 1045508
    %v330 = vsel %vm329, %v328, %v325
    %s331 = scalar_lea.vmem %s0, 2
    %s332 = smov 192
    %v333 = vld [vmem:[%s331] ss:$16 sm:%s332]
    %vm334 = vcmask 1047558
    %v335 = vsel %vm334, %v333, %v330
    %336 = vrot.lane.b32.xlu0 %v335, 16
    %v337 = vpop.permute.xlu0 %336
    %vm338 = vcmask 195712
    %339 = vst.msk [vmem:[#allocation0] ss:$8 sm:$0xf] %vm338, %v337
    %340 = vst.msk [vmem:[#allocation0] ss:$8 sm:$0xf0] %vm338, %v337
    %s341 = scalar_lea.vmem %s0, 1
    %s342 = smov 3
    %v343 = vld [vmem:[%s341] ss:$16 sm:%s342]
    %s344 = scalar_lea.vmem %s0, 1
    %s345 = smov 12
    %v346 = vld [vmem:[%s344] ss:$16 sm:%s345]
    %vm347 = vcmask 1043458
    %v348 = vsel %vm347, %v346, %v343
    %s349 = scalar_lea.vmem %s0, 1
    %s350 = smov 48
    %v351 = vld [vmem:[%s349] ss:$16 sm:%s350]
    %vm352 = vcmask 1045508
    %v353 = vsel %vm352, %v351, %v348
    %s354 = scalar_lea.vmem %s0, 1
    %s355 = smov 192
    %v356 = vld [vmem:[%s354] ss:$16 sm:%s355]
    %vm357 = vcmask 1047558
    %v358 = vsel %vm357, %v356, %v353
    %359 = vrot.lane.b32.xlu0 %v358, 8
    %v360 = vpop.permute.xlu0 %359
    %vm361 = vcmask 130112
    %362 = vst.msk [vmem:[#allocation0] ss:$8 sm:$0xf] %vm361, %v360
    %363 = vst.msk [vmem:[#allocation0] ss:$8 sm:$0xf0] %vm361, %v360
    %s365 = sshllo.u32 0, 1
    %v367 = vld [vmem:[#allocation0] sm:%s365]
    %s368 = sshllo.u32 0, 1
    %369 = vst [vmem:[%s1] sm:%s368] %v367
    %s370 = scalar_lea.vmem [#allocation0], 8
    %v371 = vld [vmem:[%s370] sm:%s365]
    %s372 = sshllo.u32 0, 1
    %s373 = scalar_lea.vmem %s1, 1
    %374 = vst [vmem:[%s373] sm:%s372] %v371
    %s375 = scalar_lea.vmem [#allocation0], 16
    %v376 = vld [vmem:[%s375] sm:%s365]
    %s377 = sshllo.u32 0, 1
    %s378 = smul.addr 1, 2
    %s379 = scalar_lea.vmem %s1, %s378
    %380 = vst [vmem:[%s379] sm:%s377] %v376
    %s381 = scalar_lea.vmem [#allocation0], 24
    %v382 = vld [vmem:[%s381] sm:%s365]
    %s383 = sshllo.u32 0, 1
    %s384 = smul.addr 1, 3
    %s385 = scalar_lea.vmem %s1, %s384
    %386 = vst [vmem:[%s385] sm:%s383] %v382
    %s387 = scalar_lea.vmem [#allocation0], 32
    %v388 = vld [vmem:[%s387] sm:%s365]
    %s389 = sshllo.u32 0, 1
    %s390 = smul.addr 1, 4
    %s391 = scalar_lea.vmem %s1, %s390
    %392 = vst [vmem:[%s391] sm:%s389] %v388
    %s393 = scalar_lea.vmem [#allocation0], 40
    %v394 = vld [vmem:[%s393] sm:%s365]
    %s395 = sshllo.u32 0, 1
    %s396 = smul.addr 1, 5
    %s397 = scalar_lea.vmem %s1, %s396
    %398 = vst [vmem:[%s397] sm:%s395] %v394
    %s399 = scalar_lea.vmem [#allocation0], 48
    %v400 = vld [vmem:[%s399] sm:%s365]
    %s401 = sshllo.u32 0, 1
    %s402 = smul.addr 1, 6
    %s403 = scalar_lea.vmem %s1, %s402
    %404 = vst [vmem:[%s403] sm:%s401] %v400
    %s405 = scalar_lea.vmem [#allocation0], 56
    %v406 = vld [vmem:[%s405] sm:%s365]
    %s407 = sshllo.u32 0, 1
    %s408 = smul.addr 1, 7
    %s409 = scalar_lea.vmem %s1, %s408
    %410 = vst [vmem:[%s409] sm:%s407] %v406

// kernel: unet_layer.5
$region0: #{unet_layer.5}
  #allocation0 [shape = 'u32[]', space=smem, size = 0x4, offset = 0x4, fixed_abs, tag = 'smem constant byte address 0x4 - core index']
  #allocation1 [shape = 'u32[144,128]{1,0:T(1,128)}', space=vmem, size = 0x12000, scoped, tag = 'internal scratch']
  %s0 = inlined_call_operand.vmem [shape: f32[8,1024], index: 0, kind: input, shape index: {}]
  %s1 = inlined_call_operand.vmem [shape: f32[1,1024], index: 1, kind: input, shape index: {}]
  %s2 = inlined_call_operand.vmem [shape: f32[1,1024], index: 2, kind: input, shape index: {}]
  %s3 = inlined_call_operand.vmem [shape: f32[8,1024], index: 3, kind: output, shape index: {}]
  %s4 = sld [smem:[#allocation0]]
  $region22: #{unet_layer.5} parent=0
    _
  %s6 = ssub.s32 1, %s4
  %s7 = scalar_select 0, %s6, %s4
  // Predicated region
  $region2: #{unet_layer.5} parent=0 // pred_check
    _
  $region3: #{unet_layer.5} parent=0 // pred_check_branch
    %9 = sbr.rel (0) target = $region5
  $region4: #{unet_layer.5} parent=0 // pred_region
    _
  $region5: #{unet_layer.5} parent=0 // pred_fallthru
    _
  // Predicated region
  $region6: #{unet_layer.5} parent=0 // pred_check
    _
  $region7: #{unet_layer.5} parent=0 // pred_check_branch
    %11 = sbr.rel (0) target = $region9
  $region8: #{unet_layer.5} parent=0 // pred_region
    _
  $region9: #{unet_layer.5} parent=0 // pred_fallthru
    _
  // Predicated region
  $region10: #{unet_layer.5} parent=0 // pred_check
    _
  $region11: #{unet_layer.5} parent=0 // pred_check_branch
    %13 = sbr.rel (0) target = $region13
  $region12: #{unet_layer.5} parent=0 // pred_region
    _
  $region13: #{unet_layer.5} parent=0 // pred_fallthru
    _
  %v14 = vld [vmem:[%s0] sm:$0xff]
  %v15 = vld [vmem:[%s0 + $0x8] sm:$0xff]
  %v16 = vld [vmem:[%s0 + $0x10] sm:$0xff]
  %v17 = vld [vmem:[%s0 + $0x18] sm:$0xff]
  %v18 = vld [vmem:[%s0 + $0x20] sm:$0xff]
  %v19 = vld [vmem:[%s0 + $0x28] sm:$0xff]
  %v20 = vld [vmem:[%s0 + $0x30] sm:$0xff]
  %v21 = vld [vmem:[%s0 + $0x38] sm:$0xff]
  %v22 = vld [vmem:[%s1] sm:$0xff]
  %v24 = vlaneseq
  %v25 = vshrl.u32 %v24, 7
  %v26 = vsub.s32 0, %v25
  %v27 = vrot.slane %v22, %v26
  %v28 = vlaneseq
  %v29 = vshrl.u32 %v28, 7
  %v30 = vsub.s32 1, %v29
  %v31 = vrot.slane %v22, %v30
  %v32 = vlaneseq
  %v33 = vshrl.u32 %v32, 7
  %v34 = vsub.s32 2, %v33
  %v35 = vrot.slane %v22, %v34
  %v36 = vlaneseq
  %v37 = vshrl.u32 %v36, 7
  %v38 = vsub.s32 3, %v37
  %v39 = vrot.slane %v22, %v38
  %v40 = vlaneseq
  %v41 = vshrl.u32 %v40, 7
  %v42 = vsub.s32 4, %v41
  %v43 = vrot.slane %v22, %v42
  %v44 = vlaneseq
  %v45 = vshrl.u32 %v44, 7
  %v46 = vsub.s32 5, %v45
  %v47 = vrot.slane %v22, %v46
  %v48 = vlaneseq
  %v49 = vshrl.u32 %v48, 7
  %v50 = vsub.s32 6, %v49
  %v51 = vrot.slane %v22, %v50
  %v52 = vlaneseq
  %v53 = vshrl.u32 %v52, 7
  %v54 = vsub.s32 7, %v53
  %v55 = vrot.slane %v22, %v54
  %v64 = vmul.f32 %v14, %v27
  %v65 = vmul.f32 %v15, %v31
  %v66 = vmul.f32 %v16, %v35
  %v67 = vmul.f32 %v17, %v39
  %v68 = vmul.f32 %v18, %v43
  %v69 = vmul.f32 %v19, %v47
  %v70 = vmul.f32 %v20, %v51
  %v71 = vmul.f32 %v21, %v55
  %v72 = vld [vmem:[%s2] sm:$0xff]
  %v74 = vlaneseq
  %v75 = vshrl.u32 %v74, 7
  %v76 = vsub.s32 0, %v75
  %v77 = vrot.slane %v72, %v76
  %v78 = vlaneseq
  %v79 = vshrl.u32 %v78, 7
  %v80 = vsub.s32 1, %v79
  %v81 = vrot.slane %v72, %v80
  %v82 = vlaneseq
  %v83 = vshrl.u32 %v82, 7
  %v84 = vsub.s32 2, %v83
  %v85 = vrot.slane %v72, %v84
  %v86 = vlaneseq
  %v87 = vshrl.u32 %v86, 7
  %v88 = vsub.s32 3, %v87
  %v89 = vrot.slane %v72, %v88
  %v90 = vlaneseq
  %v91 = vshrl.u32 %v90, 7
  %v92 = vsub.s32 4, %v91
  %v93 = vrot.slane %v72, %v92
  %v94 = vlaneseq
  %v95 = vshrl.u32 %v94, 7
  %v96 = vsub.s32 5, %v95
  %v97 = vrot.slane %v72, %v96
  %v98 = vlaneseq
  %v99 = vshrl.u32 %v98, 7
  %v100 = vsub.s32 6, %v99
  %v101 = vrot.slane %v72, %v100
  %v102 = vlaneseq
  %v103 = vshrl.u32 %v102, 7
  %v104 = vsub.s32 7, %v103
  %v105 = vrot.slane %v72, %v104
  %v114 = vadd.f32 %v64, %v77
  %v115 = vadd.f32 %v65, %v81
  %v116 = vadd.f32 %v66, %v85
  %v117 = vadd.f32 %v67, %v89
  %v118 = vadd.f32 %v68, %v93
  %v119 = vadd.f32 %v69, %v97
  %v120 = vadd.f32 %v70, %v101
  %v121 = vadd.f32 %v71, %v105
  %v122 = vmax.f32 %v114, 0.0
  %v123 = vmax.f32 %v115, 0.0
  %v124 = vmax.f32 %v116, 0.0
  %v125 = vmax.f32 %v117, 0.0
  %v126 = vmax.f32 %v118, 0.0
  %v127 = vmax.f32 %v119, 0.0
  %v128 = vmax.f32 %v120, 0.0
  %v129 = vmax.f32 %v121, 0.0
  %130 = vst [vmem:[%s3] sm:$0xff] %v122
  %131 = vst [vmem:[%s3 + $0x8] sm:$0xff] %v123
  %132 = vst [vmem:[%s3 + $0x10] sm:$0xff] %v124
  %133 = vst [vmem:[%s3 + $0x18] sm:$0xff] %v125
  %134 = vst [vmem:[%s3 + $0x20] sm:$0xff] %v126
  %135 = vst [vmem:[%s3 + $0x28] sm:$0xff] %v127
  %136 = vst [vmem:[%s3 + $0x30] sm:$0xff] %v128
  %137 = vst [vmem:[%s3 + $0x38] sm:$0xff] %v129
  // Predicated region
  $region14: #{unet_layer.5} parent=0 // pred_check
    _
  $region15: #{unet_layer.5} parent=0 // pred_check_branch
    %139 = sbr.rel (0) target = $region17
  $region16: #{unet_layer.5} parent=0 // pred_region
    _
  $region17: #{unet_layer.5} parent=0 // pred_fallthru
    _
  // Predicated region
  $region18: #{unet_layer.5} parent=0 // pred_check
    _
  $region19: #{unet_layer.5} parent=0 // pred_check_branch
    %141 = sbr.rel (0) target = $region21
  $region20: #{unet_layer.5} parent=0 // pred_region
    _
  $region21: #{unet_layer.5} parent=0 // pred_fallthru
    _

// kernel: unet_layer.6
$region0: #{unet_layer.6}
  #allocation0 [shape = 'u32[]', space=smem, size = 0x4, offset = 0x4, fixed_abs, tag = 'smem constant byte address 0x4 - core index']
  #allocation1 [shape = 'u32[144,128]{1,0:T(1,128)}', space=vmem, size = 0x12000, scoped, tag = 'internal scratch']
  #allocation2 [shape = 'f32[8,64]{1,0:T(8,128)}', space=vmem, size = 0x1000, scoped, tag = 'scratch operand']
  %s0 = inlined_call_operand.vmem [shape: f32[2,10,10,80], index: 0, kind: input, shape index: {}]
  %s1 = inlined_call_operand.vmem [shape: f32[3,3,80,64], index: 1, kind: input, shape index: {}]
  %s2 = inlined_call_operand.vmem [shape: f32[2,8,8,64], index: 2, kind: output, shape index: {0}]
  %s3 = inlined_call_operand.vmem [shape: f32[2,8,1,64], index: 3, kind: output, shape index: {1}]
  %s4 = inlined_call_operand.vmem [shape: f32[2,8,1,64], index: 4, kind: output, shape index: {2}]
  %5 = xla_tuple %s2, %s3, %s4
  %s6 = sld [smem:[#allocation0]]
  $region65: #{unet_layer.6} parent=0
    _
  %s8 = ssub.s32 1, %s6
  %s9 = scalar_select 0, %s8, %s6
  loop: start=0, step=1, limit=50
  $region2: #{unet_layer.6} parent=0 // loop_pre_header
    _
  $region3: #{unet_layer.6} parent=0 // loop_header
    %s11 = sphi 0, %s15
    %p12 = scmp.ge.s32.totalorder %s11, 50
    %s18 = sphi 0, %s37
    %s19 = sphi 0, %s33
    %s20 = sphi 0, %s29
    %s21 = sphi 0, %s18
    %s22 = sphi 0, %s19
    %s23 = sphi 0, %s20
    %s24 = sphi 0, %s21
    %s25 = sphi 0, %s22
    %s26 = sphi 0, %s23
    %s44 = sphi 0, %s46
    %s47 = sphi 0, %s44
    %s48 = sphi 0, %s47
    %s64 = sphi 0, %s48
    %s70 = sphi 0, %s72
    %s73 = sphi 0, %s70
    %s74 = sphi 0, %s73
    %s90 = sphi 0, %s74
    %s98 = sphi 0, %s100
    %s101 = sphi 0, %s98
    %s102 = sphi 0, %s101
    %s118 = sphi 0, %s102
    %s126 = sphi 0, %s128
    %s129 = sphi 0, %s126
    %s130 = sphi 0, %s129
    %s146 = sphi 0, %s130
    %s154 = sphi 0, %s156
    %s157 = sphi 0, %s154
    %s158 = sphi 0, %s157
    %s174 = sphi 0, %s158
  $region4: #{unet_layer.6} parent=0 // loop_header_branch
    %14 = sbr.rel (%p12) target = $region8
  $region5: #{unet_layer.6} parent=0 // loop_body
    %s16 = ssub.s32 %s11, 1
    %s17 = ssub.s32 %s11, 2
    %s27 = sadd.s32 1, %s20
    %p28 = scmp.ge.s32.totalorder %s27, 3
    %s29 = scalar_select %p28, 0, %s27
    %s30 = sadd.s32 1, %s19
    %s31 = scalar_select %p28, %s30, %s19
    %p32 = scmp.ge.s32.totalorder %s31, 8
    %s33 = scalar_select %p32, 0, %s31
    %s34 = sadd.s32 1, %s18
    %s35 = scalar_select %p32, %s34, %s18
    %p36 = scmp.ge.s32.totalorder %s35, 2
    %s37 = scalar_select %p36, 0, %s35
    %s38 = sadd.s32 %s19, %s20
    %s39 = sadd.s32 %s33, %s29
    %s40 = ssub.s32 %s18, %s37
    %s41 = ssub.s32 %s38, %s39
    %s42 = sor.u32 %s40, %s41
    %p43 = scmp.eq.s32.totalorder %s42, 0
    %s45 = sadd.s32 %s44, 1
    %s46 = scalar_select %p43, %s44, %s45
    %p49 = pneg %p43
    %p50 = scmp.eq.s32.totalorder %s11, 47
    %p51 = por %p49, %p50
    %p52 = scmp.ne.s32.totalorder %s44, %s47
    %p53 = scmp.eq.s32.totalorder %s11, 0
    %p54 = por %p52, %p53
    %p55 = scmp.ne.s32.totalorder %s44, %s47
    %p56 = scmp.eq.s32.totalorder %s16, 47
    %p57 = por %p55, %p56
    %p58 = scmp.ne.s32.totalorder %s47, %s48
    %p59 = scmp.eq.s32.totalorder %s16, 0
    %p60 = por %p58, %p59
    %p61 = scmp.ne.s32.totalorder %s47, %s48
    %p62 = scmp.eq.s32.totalorder %s17, 47
    %p63 = por %p61, %p62
    %p65 = scmp.ne.s32.totalorder %s48, %s64
    %p66 = scmp.eq.s32.totalorder %s17, 0
    %p67 = por %p65, %p66
    %s68 = ssub.s32 %s20, %s29
    %p69 = scmp.eq.s32.totalorder %s68, 0
    %s71 = sadd.s32 %s70, 1
    %s72 = scalar_select %p69, %s70, %s71
    %p75 = pneg %p69
    %p76 = scmp.eq.s32.totalorder %s11, 47
    %p77 = por %p75, %p76
    %p78 = scmp.ne.s32.totalorder %s70, %s73
    %p79 = scmp.eq.s32.totalorder %s11, 0
    %p80 = por %p78, %p79
    %p81 = scmp.ne.s32.totalorder %s70, %s73
    %p82 = scmp.eq.s32.totalorder %s16, 47
    %p83 = por %p81, %p82
    %p84 = scmp.ne.s32.totalorder %s73, %s74
    %p85 = scmp.eq.s32.totalorder %s16, 0
    %p86 = por %p84, %p85
    %p87 = scmp.ne.s32.totalorder %s73, %s74
    %p88 = scmp.eq.s32.totalorder %s17, 47
    %p89 = por %p87, %p88
    %p91 = scmp.ne.s32.totalorder %s74, %s90
    %p92 = scmp.eq.s32.totalorder %s17, 0
    %p93 = por %p91, %p92
    %s94 = ssub.s32 %s18, %s37
    %s95 = ssub.s32 %s19, %s33
    %s96 = sor.u32 %s94, %s95
    %p97 = scmp.eq.s32.totalorder %s96, 0
    %s99 = sadd.s32 %s98, 1
    %s100 = scalar_select %p97, %s98, %s99
    %p103 = pneg %p97
    %p104 = scmp.eq.s32.totalorder %s11, 47
    %p105 = por %p103, %p104
    %p106 = scmp.ne.s32.totalorder %s98, %s101
    %p107 = scmp.eq.s32.totalorder %s11, 0
    %p108 = por %p106, %p107
    %p109 = scmp.ne.s32.totalorder %s98, %s101
    %p110 = scmp.eq.s32.totalorder %s16, 47
    %p111 = por %p109, %p110
    %p112 = scmp.ne.s32.totalorder %s101, %s102
    %p113 = scmp.eq.s32.totalorder %s16, 0
    %p114 = por %p112, %p113
    %p115 = scmp.ne.s32.totalorder %s101, %s102
    %p116 = scmp.eq.s32.totalorder %s17, 47
    %p117 = por %p115, %p116
    %p119 = scmp.ne.s32.totalorder %s102, %s118
    %p120 = scmp.eq.s32.totalorder %s17, 0
    %p121 = por %p119, %p120
    %s122 = ssub.s32 %s18, %s37
    %s123 = ssub.s32 %s19, %s33
    %s124 = sor.u32 %s122, %s123
    %p125 = scmp.eq.s32.totalorder %s124, 0
    %s127 = sadd.s32 %s126, 1
    %s128 = scalar_select %p125, %s126, %s127
    %p131 = pneg %p125
    %p132 = scmp.eq.s32.totalorder %s11, 47
    %p133 = por %p131, %p132
    %p134 = scmp.ne.s32.totalorder %s126, %s129
    %p135 = scmp.eq.s32.totalorder %s11, 0
    %p136 = por %p134, %p135
    %p137 = scmp.ne.s32.totalorder %s126, %s129
    %p138 = scmp.eq.s32.totalorder %s16, 47
    %p139 = por %p137, %p138
    %p140 = scmp.ne.s32.totalorder %s129, %s130
    %p141 = scmp.eq.s32.totalorder %s16, 0
    %p142 = por %p140, %p141
    %p143 = scmp.ne.s32.totalorder %s129, %s130
    %p144 = scmp.eq.s32.totalorder %s17, 47
    %p145 = por %p143, %p144
    %p147 = scmp.ne.s32.totalorder %s130, %s146
    %p148 = scmp.eq.s32.totalorder %s17, 0
    %p149 = por %p147, %p148
    %s150 = ssub.s32 %s18, %s37
    %s151 = ssub.s32 %s19, %s33
    %s152 = sor.u32 %s150, %s151
    %p153 = scmp.eq.s32.totalorder %s152, 0
    %s155 = sadd.s32 %s154, 1
    %s156 = scalar_select %p153, %s154, %s155
    %p159 = pneg %p153
    %p160 = scmp.eq.s32.totalorder %s11, 47
    %p161 = por %p159, %p160
    %p162 = scmp.ne.s32.totalorder %s154, %s157
    %p163 = scmp.eq.s32.totalorder %s11, 0
    %p164 = por %p162, %p163
    %p165 = scmp.ne.s32.totalorder %s154, %s157
    %p166 = scmp.eq.s32.totalorder %s16, 47
    %p167 = por %p165, %p166
    %p168 = scmp.ne.s32.totalorder %s157, %s158
    %p169 = scmp.eq.s32.totalorder %s16, 0
    %p170 = por %p168, %p169
    %p171 = scmp.ne.s32.totalorder %s157, %s158
    %p172 = scmp.eq.s32.totalorder %s17, 47
    %p173 = por %p171, %p172
    %p175 = scmp.ne.s32.totalorder %s158, %s174
    %p176 = scmp.eq.s32.totalorder %s17, 0
    %p177 = por %p175, %p176
    %p178 = scmp.le.s32.totalorder 1, %s11
    %p179 = scmp.lt.s32.totalorder %s11, 49
    %p180 = pnand %p178, %p179
    %p181 = pneg %p180
    // Predicated region
    $region9: #{unet_layer.6} parent=5 // pred_check
      _
    $region10: #{unet_layer.6} parent=5 // pred_check_branch
      %183 = sbr.rel (%p180) target = $region12
    $region11: #{unet_layer.6} parent=5 // pred_region
      %s184 = ssub.s32 %s11, 1
    $region12: #{unet_layer.6} parent=5 // pred_fallthru
      _
    %p185 = scmp.lt.s32.totalorder %s11, 48
    // Predicated region
    $region13: #{unet_layer.6} parent=5 // pred_check
      %p186 = pneg %p185
    $region14: #{unet_layer.6} parent=5 // pred_check_branch
      %188 = sbr.rel (%p186) target = $region16
    $region15: #{unet_layer.6} parent=5 // pred_region
      // Predicated region
      $region17: #{unet_layer.6} parent=15 // pred_check
        %p189 = pneg %p54
      $region18: #{unet_layer.6} parent=15 // pred_check_branch
        %191 = sbr.rel (%p189) target = $region20
      $region19: #{unet_layer.6} parent=15 // pred_region
        %s192 = sadd.s32 %s19, %s20
        %p193 = scmp.lt.s32.totalorder %s18, 1
        %s194 = scalar_select %p193, %s18, 1
        %p195 = scmp.lt.s32.totalorder %s192, 9
        %s196 = scalar_select %p195, %s192, 9
        %s197 = smul.addr %s196, 2
        %s198 = smul.addr %s194, 20
        %s199 = sadd.s32 %s197, %s198
        %s200 = smul.addr %s199, 8
        %s201 = scalar_lea.vmem %s0, %s200
        %s202 = sadd.s32 %s19, %s20
      $region20: #{unet_layer.6} parent=15 // pred_fallthru
        _
      // Predicated region
      $region21: #{unet_layer.6} parent=15 // pred_check
        %p203 = pneg %p80
      $region22: #{unet_layer.6} parent=15 // pred_check_branch
        %205 = sbr.rel (%p203) target = $region24
      $region23: #{unet_layer.6} parent=15 // pred_region
        %p206 = scmp.lt.s32.totalorder %s20, 2
        %s207 = scalar_select %p206, %s20, 2
        %s208 = smul.addr %s207, 30
        %s209 = smul.addr %s208, 8
        %s210 = scalar_lea.vmem %s1, %s209
      $region24: #{unet_layer.6} parent=15 // pred_fallthru
        _
    $region16: #{unet_layer.6} parent=5 // pred_fallthru
      _
    %p211 = scmp.le.s32.totalorder 1, %s11
    %p212 = scmp.lt.s32.totalorder %s11, 49
    %p213 = pnand %p211, %p212
    %p214 = pneg %p213
    // Predicated region
    $region25: #{unet_layer.6} parent=5 // pred_check
      _
    $region26: #{unet_layer.6} parent=5 // pred_check_branch
      %216 = sbr.rel (%p213) target = $region28
    $region27: #{unet_layer.6} parent=5 // pred_region
      %s217 = ssub.s32 %s11, 1
      %s218 = sadd.s32 %s22, %s23
      %p219 = scmp.lt.s32.totalorder %s21, 1
      %s220 = scalar_select %p219, %s21, 1
      %p221 = scmp.lt.s32.totalorder %s218, 9
      %s222 = scalar_select %p221, %s218, 9
      %s223 = smul.addr %s222, 2
      %s224 = smul.addr %s220, 20
      %s225 = sadd.s32 %s223, %s224
      %s226 = smul.addr %s225, 8
      %s227 = scalar_lea.vmem %s0, %s226
      %p228 = pneg %p60
      %p229 = pneg %p57
      %p230 = scmp.lt.s32.totalorder %s23, 2
      %s231 = scalar_select %p230, %s23, 2
      %s232 = smul.addr %s231, 30
      %s233 = smul.addr %s232, 8
      %s234 = scalar_lea.vmem %s1, %s233
      %p235 = pneg %p86
      %p236 = pneg %p83
      %p237 = pneg %p114
      %p238 = pneg %p111
      %p239 = scmp.lt.s32.totalorder %s21, 1
      %s240 = scalar_select %p239, %s21, 1
      %p241 = scmp.lt.s32.totalorder %s22, 7
      %s242 = scalar_select %p241, %s22, 7
      %s243 = smul.addr %s240, 8
      %s244 = sadd.s32 %s242, %s243
      %s245 = smul.addr %s244, 8
      %s246 = scalar_lea.vmem %s2, %s245
      %p247 = pneg %p142
      %p248 = pneg %p139
      %p249 = scmp.lt.s32.totalorder %s21, 1
      %s250 = scalar_select %p249, %s21, 1
      %p251 = scmp.lt.s32.totalorder %s22, 7
      %s252 = scalar_select %p251, %s22, 7
      %s253 = smul.addr %s250, 8
      %s254 = sadd.s32 %s252, %s253
      %s255 = scalar_lea.vmem %s3, %s254
      %p256 = pneg %p170
      %p257 = pneg %p167
      %p258 = scmp.lt.s32.totalorder %s21, 1
      %s259 = scalar_select %p258, %s21, 1
      %p260 = scmp.lt.s32.totalorder %s22, 7
      %s261 = scalar_select %p260, %s22, 7
      %s262 = smul.addr %s259, 8
      %s263 = sadd.s32 %s261, %s262
      %s264 = scalar_lea.vmem %s4, %s263
      %s265 = sadd.s32 %s22, %s23
      %p266 = scmp.lt.s32.totalorder %s21, 1
      %s267 = scalar_select %p266, %s21, 1
      %p268 = scmp.lt.s32.totalorder %s265, 9
      %s269 = scalar_select %p268, %s265, 9
      %s270 = smul.addr %s269, 2
      %s271 = smul.addr %s267, 20
      %s272 = sadd.s32 %s270, %s271
      %s273 = smul.addr %s272, 8
      %s274 = scalar_lea.vmem %s0, %s273
      %s275 = sadd.s32 %s22, %s23
      %p276 = scmp.lt.s32.totalorder %s23, 2
      %s277 = scalar_select %p276, %s23, 2
      %s278 = smul.addr %s277, 30
      %s279 = smul.addr %s278, 8
      %s280 = scalar_lea.vmem %s1, %s279
      %p281 = scmp.lt.s32.totalorder %s21, 1
      %s282 = scalar_select %p281, %s21, 1
      %p283 = scmp.lt.s32.totalorder %s22, 7
      %s284 = scalar_select %p283, %s22, 7
      %s285 = smul.addr %s282, 8
      %s286 = sadd.s32 %s284, %s285
      %s287 = smul.addr %s286, 8
      %s288 = scalar_lea.vmem %s2, %s287
      %p289 = scmp.lt.s32.totalorder %s21, 1
      %s290 = scalar_select %p289, %s21, 1
      %p291 = scmp.lt.s32.totalorder %s22, 7
      %s292 = scalar_select %p291, %s22, 7
      %s293 = smul.addr %s290, 8
      %s294 = sadd.s32 %s292, %s293
      %s295 = scalar_lea.vmem %s3, %s294
      %p296 = scmp.lt.s32.totalorder %s21, 1
      %s297 = scalar_select %p296, %s21, 1
      %p298 = scmp.lt.s32.totalorder %s22, 7
      %s299 = scalar_select %p298, %s22, 7
      %s300 = smul.addr %s297, 8
      %s301 = sadd.s32 %s299, %s300
      %s302 = scalar_lea.vmem %s4, %s301
      %p303 = scmp.eq.s32.totalorder %s23, 0
      // Predicated region
      $region29: #{unet_layer.6} parent=27 // pred_check
        %p304 = pneg %p303
      $region30: #{unet_layer.6} parent=27 // pred_check_branch
        %306 = sbr.rel (%p304) target = $region32
      $region31: #{unet_layer.6} parent=27 // pred_region
        %vm307 = vcmask 523264
        %308 = vst.msk [vmem:[#allocation2] sm:$0xff] %vm307, 0.0
      $region32: #{unet_layer.6} parent=27 // pred_fallthru
        _
      %v309 = vld [vmem:[#allocation2] sm:$0xff]
      %v310 = vld [vmem:[%s274] sm:$0xff]
      %v311 = vld [vmem:[%s280] sm:$0xff]
      %v312 = vld [vmem:[%s280 + $0x8] sm:$0xff]
      %v313 = vld [vmem:[%s280 + $0x10] sm:$0xff]
      %v314 = vld [vmem:[%s280 + $0x18] sm:$0xff]
      %v315 = vld [vmem:[%s280 + $0x20] sm:$0xff]
      %v316 = vld [vmem:[%s280 + $0x28] sm:$0xff]
      %v317 = vld [vmem:[%s280 + $0x30] sm:$0xff]
      %v318 = vld [vmem:[%s280 + $0x38] sm:$0xff]
      %v319 = vld [vmem:[%s280 + $0x40] sm:$0xff]
      %v320 = vld [vmem:[%s280 + $0x48] sm:$0xff]
      %v321 = vld [vmem:[%s274 + $0x1] sm:$0xff]
      %s322 = scalar_lea.vmem %s280, 80
      %v323 = vld [vmem:[%s322] sm:$0xff]
      %v324 = vld [vmem:[%s322 + $0x8] sm:$0xff]
      %v325 = vld [vmem:[%s322 + $0x10] sm:$0xff]
      %v326 = vld [vmem:[%s322 + $0x18] sm:$0xff]
      %v327 = vld [vmem:[%s322 + $0x20] sm:$0xff]
      %v328 = vld [vmem:[%s322 + $0x28] sm:$0xff]
      %v329 = vld [vmem:[%s322 + $0x30] sm:$0xff]
      %v330 = vld [vmem:[%s322 + $0x38] sm:$0xff]
      %v331 = vld [vmem:[%s322 + $0x40] sm:$0xff]
      %v332 = vld [vmem:[%s322 + $0x48] sm:$0xff]
      %vm333 = vcmask 654336
      %v335 = vsel %vm333, %v321, 0
      %337 = vmatprep.subr.mxu0 0.0
      %338 = vmatpush1.msra.mxu0 %v323
      %339 = vmatprep.subr.mxu0 0.0
      %340 = vmatpush1.msra.mxu0 %v324
      %341 = vmatprep.subr.mxu0 0.0
      %342 = vmatpush1.msra.mxu0 %v325
      %343 = vmatprep.subr.mxu0 0.0
      %344 = vmatpush1.msra.mxu0 %v326
      %345 = vmatprep.subr.mxu0 0.0
      %346 = vmatpush1.msra.mxu0 %v327
      %347 = vmatprep.subr.mxu0 0.0
      %348 = vmatpush1.msra.mxu0 %v328
      %349 = vmatprep.subr.mxu0 0.0
      %350 = vmatpush1.msra.mxu0 %v329
      %351 = vmatprep.subr.mxu0 0.0
      %352 = vmatpush1.msra.mxu0 %v330
      %353 = vmatprep.subr.mxu0 0.0
      %354 = vmatpush1.msra.mxu0 %v331
      %355 = vmatprep.subr.mxu0 0.0
      %356 = vmatpush1.msra.mxu0 %v332
      %357 = vmatprep.subr.mxu0 0.0
      %358 = vmatpush1.msra.mxu0 0.0
      %359 = vmatprep.subr.mxu0 0.0
      %360 = vmatpush1.msra.mxu0 0.0
      %361 = vmatprep.subr.mxu0 0.0
      %362 = vmatpush1.msra.mxu0 0.0
      %363 = vmatprep.subr.mxu0 0.0
      %364 = vmatpush1.msra.mxu0 0.0
      %365 = vmatprep.subr.mxu0 0.0
      %366 = vmatpush1.msra.mxu0 0.0
      %367 = vmatprep.subr.mxu0 0.0
      %368 = vmatpush1.msra.mxu0 0.0
      %369 = vmatprep.subr.mxu0 0.0
      %370 = vmatpush1.msra.mxu0 0.0
      %371 = vmatprep.subr.mxu0 0.0
      %372 = vmatpush1.msra.mxu0 0.0
      %373 = vmatprep.subr.mxu0 0.0
      %374 = vmatpush1.msra.mxu0 0.0
      %375 = vmatprep.subr.mxu0 0.0
      %376 = vmatpush1.msra.mxu0 0.0
      %377 = vmatprep.subr.mxu0 0.0
      %378 = vmatpush1.msra.mxu0 0.0
      %379 = vmatprep.subr.mxu0 0.0
      %380 = vmatpush1.msra.mxu0 0.0
      %381 = vmatprep.subr.mxu0 0.0
      %382 = vmatpush1.msra.mxu0 0.0
      %383 = vmatprep.subr.mxu0 0.0
      %384 = vmatpush1.msra.mxu0 0.0
      %385 = vmatprep.subr.mxu0 0.0
      %386 = vmatpush1.msra.mxu0 0.0
      %387 = vmatprep.subr.mxu0 0.0
      %388 = vmatpush1.msra.mxu0 0.0
      %389 = vmatprep.subr.mxu0 0.0
      %390 = vmatpush1.msra.mxu0 0.0
      %391 = vmatprep.subr.mxu0 0.0
      %392 = vmatpush1.msra.mxu0 0.0
      %393 = vmatprep.subr.mxu0 0.0
      %394 = vmatpush1.msra.mxu0 0.0
      %395 = vmatprep.subr.mxu0 0.0
      %396 = vmatpush1.msra.mxu0 0.0
      %397 = vmatprep.subr.mxu0 0.0
      %398 = vmatpush1.msra.mxu0 0.0
      %399 = vmatprep.subr.mxu0 0.0
      %400 = vmatpush1.msra.mxu0 0.0
      %401 = vmatprep.mubr.f32.mxu0 0.0
      %402 = vmatmul.mubr.f32.gmra.mrb[0].mxu0 %v335
      %v403 = vpop.f32.mrb[0].mxu0
      %v404 = vadd.f32 0.0, %v403
      %v405 = vpop.f32.mrb[0].mxu0
      %406 = vdwg.mxu0
      %v408 = vsel %vm333, %v310, 0
      %410 = vmatprep.subr.mxu0 0.0
      %411 = vmatpush1.msra.mxu0 %v311
      %412 = vmatprep.subr.mxu0 0.0
      %413 = vmatpush1.msra.mxu0 %v312
      %414 = vmatprep.subr.mxu0 0.0
      %415 = vmatpush1.msra.mxu0 %v313
      %416 = vmatprep.subr.mxu0 0.0
      %417 = vmatpush1.msra.mxu0 %v314
      %418 = vmatprep.subr.mxu0 0.0
      %419 = vmatpush1.msra.mxu0 %v315
      %420 = vmatprep.subr.mxu0 0.0
      %421 = vmatpush1.msra.mxu0 %v316
      %422 = vmatprep.subr.mxu0 0.0
      %423 = vmatpush1.msra.mxu0 %v317
      %424 = vmatprep.subr.mxu0 0.0
      %425 = vmatpush1.msra.mxu0 %v318
      %426 = vmatprep.subr.mxu0 0.0
      %427 = vmatpush1.msra.mxu0 %v319
      %428 = vmatprep.subr.mxu0 0.0
      %429 = vmatpush1.msra.mxu0 %v320
      %430 = vmatprep.subr.mxu0 0.0
      %431 = vmatpush1.msra.mxu0 0.0
      %432 = vmatprep.subr.mxu0 0.0
      %433 = vmatpush1.msra.mxu0 0.0
      %434 = vmatprep.subr.mxu0 0.0
      %435 = vmatpush1.msra.mxu0 0.0
      %436 = vmatprep.subr.mxu0 0.0
      %437 = vmatpush1.msra.mxu0 0.0
      %438 = vmatprep.subr.mxu0 0.0
      %439 = vmatpush1.msra.mxu0 0.0
      %440 = vmatprep.subr.mxu0 0.0
      %441 = vmatpush1.msra.mxu0 0.0
      %442 = vmatprep.subr.mxu0 0.0
      %443 = vmatpush1.msra.mxu0 0.0
      %444 = vmatprep.subr.mxu0 0.0
      %445 = vmatpush1.msra.mxu0 0.0
      %446 = vmatprep.subr.mxu0 0.0
      %447 = vmatpush1.msra.mxu0 0.0
      %448 = vmatprep.subr.mxu0 0.0
      %449 = vmatpush1.msra.mxu0 0.0
      %450 = vmatprep.subr.mxu0 0.0
      %451 = vmatpush1.msra.mxu0 0.0
      %452 = vmatprep.subr.mxu0 0.0
      %453 = vmatpush1.msra.mxu0 0.0
      %454 = vmatprep.subr.mxu0 0.0
      %455 = vmatpush1.msra.mxu0 0.0
      %456 = vmatprep.subr.mxu0 0.0
      %457 = vmatpush1.msra.mxu0 0.0
      %458 = vmatprep.subr.mxu0 0.0
      %459 = vmatpush1.msra.mxu0 0.0
      %460 = vmatprep.subr.mxu0 0.0
      %461 = vmatpush1.msra.mxu0 0.0
      %462 = vmatprep.subr.mxu0 0.0
      %463 = vmatpush1.msra.mxu0 0.0
      %464 = vmatprep.subr.mxu0 0.0
      %465 = vmatpush1.msra.mxu0 0.0
      %466 = vmatprep.subr.mxu0 0.0
      %467 = vmatpush1.msra.mxu0 0.0
      %468 = vmatprep.subr.mxu0 0.0
      %469 = vmatpush1.msra.mxu0 0.0
      %470 = vmatprep.subr.mxu0 0.0
      %471 = vmatpush1.msra.mxu0 0.0
      %472 = vmatprep.subr.mxu0 0.0
      %473 = vmatpush1.msra.mxu0 0.0
      %474 = vmatprep.mubr.f32.mxu0 0.0
      %475 = vmatmul.mubr.f32.gmra.mrb[0].mxu0 %v408
      %v476 = vpop.f32.mrb[0].mxu0
      %v477 = vadd.f32 %v404, %v476
      %v478 = vpop.f32.mrb[0].mxu0
      %479 = vdwg.mxu0
      %v480 = vld [vmem:[%s274 + $0x2] sm:$0xff]
      %s481 = scalar_lea.vmem %s280, 160
      %v482 = vld [vmem:[%s481] sm:$0xff]
      %v483 = vld [vmem:[%s481 + $0x8] sm:$0xff]
      %v484 = vld [vmem:[%s481 + $0x10] sm:$0xff]
      %v485 = vld [vmem:[%s481 + $0x18] sm:$0xff]
      %v486 = vld [vmem:[%s481 + $0x20] sm:$0xff]
      %v487 = vld [vmem:[%s481 + $0x28] sm:$0xff]
      %v488 = vld [vmem:[%s481 + $0x30] sm:$0xff]
      %v489 = vld [vmem:[%s481 + $0x38] sm:$0xff]
      %v490 = vld [vmem:[%s481 + $0x40] sm:$0xff]
      %v491 = vld [vmem:[%s481 + $0x48] sm:$0xff]
      %v493 = vsel %vm333, %v480, 0
      %495 = vmatprep.subr.mxu0 0.0
      %496 = vmatpush1.msra.mxu0 %v482
      %497 = vmatprep.subr.mxu0 0.0
      %498 = vmatpush1.msra.mxu0 %v483
      %499 = vmatprep.subr.mxu0 0.0
      %500 = vmatpush1.msra.mxu0 %v484
      %501 = vmatprep.subr.mxu0 0.0
      %502 = vmatpush1.msra.mxu0 %v485
      %503 = vmatprep.subr.mxu0 0.0
      %504 = vmatpush1.msra.mxu0 %v486
      %505 = vmatprep.subr.mxu0 0.0
      %506 = vmatpush1.msra.mxu0 %v487
      %507 = vmatprep.subr.mxu0 0.0
      %508 = vmatpush1.msra.mxu0 %v488
      %509 = vmatprep.subr.mxu0 0.0
      %510 = vmatpush1.msra.mxu0 %v489
      %511 = vmatprep.subr.mxu0 0.0
      %512 = vmatpush1.msra.mxu0 %v490
      %513 = vmatprep.subr.mxu0 0.0
      %514 = vmatpush1.msra.mxu0 %v491
      %515 = vmatprep.subr.mxu0 0.0
      %516 = vmatpush1.msra.mxu0 0.0
      %517 = vmatprep.subr.mxu0 0.0
      %518 = vmatpush1.msra.mxu0 0.0
      %519 = vmatprep.subr.mxu0 0.0
      %520 = vmatpush1.msra.mxu0 0.0
      %521 = vmatprep.subr.mxu0 0.0
      %522 = vmatpush1.msra.mxu0 0.0
      %523 = vmatprep.subr.mxu0 0.0
      %524 = vmatpush1.msra.mxu0 0.0
      %525 = vmatprep.subr.mxu0 0.0
      %526 = vmatpush1.msra.mxu0 0.0
      %527 = vmatprep.subr.mxu0 0.0
      %528 = vmatpush1.msra.mxu0 0.0
      %529 = vmatprep.subr.mxu0 0.0
      %530 = vmatpush1.msra.mxu0 0.0
      %531 = vmatprep.subr.mxu0 0.0
      %532 = vmatpush1.msra.mxu0 0.0
      %533 = vmatprep.subr.mxu0 0.0
      %534 = vmatpush1.msra.mxu0 0.0
      %535 = vmatprep.subr.mxu0 0.0
      %536 = vmatpush1.msra.mxu0 0.0
      %537 = vmatprep.subr.mxu0 0.0
      %538 = vmatpush1.msra.mxu0 0.0
      %539 = vmatprep.subr.mxu0 0.0
      %540 = vmatpush1.msra.mxu0 0.0
      %541 = vmatprep.subr.mxu0 0.0
      %542 = vmatpush1.msra.mxu0 0.0
      %543 = vmatprep.subr.mxu0 0.0
      %544 = vmatpush1.msra.mxu0 0.0
      %545 = vmatprep.subr.mxu0 0.0
      %546 = vmatpush1.msra.mxu0 0.0
      %547 = vmatprep.subr.mxu0 0.0
      %548 = vmatpush1.msra.mxu0 0.0
      %549 = vmatprep.subr.mxu0 0.0
      %550 = vmatpush1.msra.mxu0 0.0
      %551 = vmatprep.subr.mxu0 0.0
      %552 = vmatpush1.msra.mxu0 0.0
      %553 = vmatprep.subr.mxu0 0.0
      %554 = vmatpush1.msra.mxu0 0.0
      %555 = vmatprep.subr.mxu0 0.0
      %556 = vmatpush1.msra.mxu0 0.0
      %557 = vmatprep.subr.mxu0 0.0
      %558 = vmatpush1.msra.mxu0 0.0
      %559 = vmatprep.mubr.f32.mxu0 0.0
      %560 = vmatmul.mubr.f32.gmra.mrb[0].mxu0 %v493
      %v561 = vpop.f32.mrb[0].mxu0
      %v562 = vadd.f32 0.0, %v561
      %v563 = vpop.f32.mrb[0].mxu0
      %564 = vdwg.mxu0
      %v565 = vadd.f32 %v477, %v562
      %v566 = vadd.f32 %v309, %v565
      %vm567 = vcmask 523264
      %568 = vst.msk [vmem:[#allocation2] sm:$0xff] %vm567, %v566
      %p569 = scmp.eq.s32.totalorder %s23, 2
      // Predicated region
      $region33: #{unet_layer.6} parent=27 // pred_check
        %p570 = pneg %p569
      $region34: #{unet_layer.6} parent=27 // pred_check_branch
        %572 = sbr.rel (%p570) target = $region36
      $region35: #{unet_layer.6} parent=27 // pred_region
        %v573 = vld [vmem:[#allocation2] sm:$0xff]
        %574 = vst.msk [vmem:[%s288] sm:$0xff] %vm567, %v573
        %v575 = vsel %vm567, %v573, 0.0
        %v576 = vrot.slane %v575, 4
        %v577 = vadd.f32 %v575, %v576
        %v578 = vrot.slane %v577, 2
        %v579 = vadd.f32 %v577, %v578
        %v580 = vrot.slane %v579, 1
        %v581 = vadd.f32 %v579, %v580
        %vm582 = vcmask 516096
        %583 = vst.msk [vmem:[%s295] sm:$0x1] %vm582, %v581
        %v584 = vmul.f32 %v573, %v573
        %v585 = vsel %vm567, %v584, 0.0
        %v586 = vrot.slane %v585, 4
        %v587 = vadd.f32 %v585, %v586
        %v588 = vrot.slane %v587, 2
        %v589 = vadd.f32 %v587, %v588
        %v590 = vrot.slane %v589, 1
        %v591 = vadd.f32 %v589, %v590
        %592 = vst.msk [vmem:[%s302] sm:$0x1] %vm582, %v591
      $region36: #{unet_layer.6} parent=27 // pred_fallthru
        _
      %p593 = scmp.lt.s32.totalorder %s21, 1
      %s594 = scalar_select %p593, %s21, 1
      %p595 = scmp.lt.s32.totalorder %s22, 7
      %s596 = scalar_select %p595, %s22, 7
      %s597 = smul.addr %s594, 8
      %s598 = sadd.s32 %s596, %s597
      %s599 = smul.addr %s598, 8
      %s600 = scalar_lea.vmem %s2, %s599
      %p601 = scmp.lt.s32.totalorder %s21, 1
      %s602 = scalar_select %p601, %s21, 1
      %p603 = scmp.lt.s32.totalorder %s22, 7
      %s604 = scalar_select %p603, %s22, 7
      %s605 = smul.addr %s602, 8
      %s606 = sadd.s32 %s604, %s605
      %s607 = scalar_lea.vmem %s3, %s606
      %p608 = scmp.lt.s32.totalorder %s21, 1
      %s609 = scalar_select %p608, %s21, 1
      %p610 = scmp.lt.s32.totalorder %s22, 7
      %s611 = scalar_select %p610, %s22, 7
      %s612 = smul.addr %s609, 8
      %s613 = sadd.s32 %s611, %s612
      %s614 = scalar_lea.vmem %s4, %s613
      // Predicated region
      $region37: #{unet_layer.6} parent=27 // pred_check
        %p615 = pneg %p111
      $region38: #{unet_layer.6} parent=27 // pred_check_branch
        %617 = sbr.rel (%p615) target = $region40
      $region39: #{unet_layer.6} parent=27 // pred_region
        _
      $region40: #{unet_layer.6} parent=27 // pred_fallthru
        _
      // Predicated region
      $region41: #{unet_layer.6} parent=27 // pred_check
        %p618 = pneg %p139
      $region42: #{unet_layer.6} parent=27 // pred_check_branch
        %620 = sbr.rel (%p618) target = $region44
      $region43: #{unet_layer.6} parent=27 // pred_region
        _
      $region44: #{unet_layer.6} parent=27 // pred_fallthru
        _
      // Predicated region
      $region45: #{unet_layer.6} parent=27 // pred_check
        %p621 = pneg %p167
      $region46: #{unet_layer.6} parent=27 // pred_check_branch
        %623 = sbr.rel (%p621) target = $region48
      $region47: #{unet_layer.6} parent=27 // pred_region
        _
      $region48: #{unet_layer.6} parent=27 // pred_fallthru
        _
    $region28: #{unet_layer.6} parent=5 // pred_fallthru
      _
    %p624 = scmp.le.s32.totalorder 2, %s11
    // Predicated region
    $region49: #{unet_layer.6} parent=5 // pred_check
      %p625 = pneg %p624
    $region50: #{unet_layer.6} parent=5 // pred_check_branch
      %627 = sbr.rel (%p625) target = $region52
    $region51: #{unet_layer.6} parent=5 // pred_region
      %s628 = ssub.s32 %s11, 2
      // Predicated region
      $region53: #{unet_layer.6} parent=51 // pred_check
        %p629 = pneg %p117
      $region54: #{unet_layer.6} parent=51 // pred_check_branch
        %631 = sbr.rel (%p629) target = $region56
      $region55: #{unet_layer.6} parent=51 // pred_region
        %p632 = scmp.lt.s32.totalorder %s24, 1
        %s633 = scalar_select %p632, %s24, 1
        %p634 = scmp.lt.s32.totalorder %s25, 7
        %s635 = scalar_select %p634, %s25, 7
        %s636 = smul.addr %s633, 8
        %s637 = sadd.s32 %s635, %s636
        %s638 = smul.addr %s637, 8
        %s639 = scalar_lea.vmem %s2, %s638
      $region56: #{unet_layer.6} parent=51 // pred_fallthru
        _
      // Predicated region
      $region57: #{unet_layer.6} parent=51 // pred_check
        %p640 = pneg %p145
      $region58: #{unet_layer.6} parent=51 // pred_check_branch
        %642 = sbr.rel (%p640) target = $region60
      $region59: #{unet_layer.6} parent=51 // pred_region
        %p643 = scmp.lt.s32.totalorder %s24, 1
        %s644 = scalar_select %p643, %s24, 1
        %p645 = scmp.lt.s32.totalorder %s25, 7
        %s646 = scalar_select %p645, %s25, 7
        %s647 = smul.addr %s644, 8
        %s648 = sadd.s32 %s646, %s647
        %s649 = scalar_lea.vmem %s3, %s648
      $region60: #{unet_layer.6} parent=51 // pred_fallthru
        _
      // Predicated region
      $region61: #{unet_layer.6} parent=51 // pred_check
        %p650 = pneg %p173
      $region62: #{unet_layer.6} parent=51 // pred_check_branch
        %652 = sbr.rel (%p650) target = $region64
      $region63: #{unet_layer.6} parent=51 // pred_region
        %p653 = scmp.lt.s32.totalorder %s24, 1
        %s654 = scalar_select %p653, %s24, 1
        %p655 = scmp.lt.s32.totalorder %s25, 7
        %s656 = scalar_select %p655, %s25, 7
        %s657 = smul.addr %s654, 8
        %s658 = sadd.s32 %s656, %s657
        %s659 = scalar_lea.vmem %s4, %s658
      $region64: #{unet_layer.6} parent=51 // pred_fallthru
        _
    $region52: #{unet_layer.6} parent=5 // pred_fallthru
      _
  $region6: #{unet_layer.6} parent=0 // loop_footer
    %s15 = sadd.s32 1, %s11
  $region7: #{unet_layer.6} parent=0 // loop_footer_branch
    %10 = sbr.rel target = $region3
  $region8: #{unet_layer.6} parent=0 // loop_exit
    _

</llo_original>
